<compile_context>
chip_gen: v5e
topology: v5e:2x2
jax: 0.10.0
libtpu: 0.0.40
codegen_flags: <defaults>
</compile_context>

<pallas_src>
import jax
import jax.numpy as jnp
from jax.experimental import pallas as pl
from jax.experimental.pallas import tpu as pltpu

# ----------------------------- model sizes ---------------------------------
BATCH = 16          # total batch (multiple of TB)
TB = 8              # batch tile per grid step (sublane-aligned)
C, H, W = 4, 16, 16
IN_DIM = C * H * W  # 1024, flattened NCHW image
HID = 256           # encoder output width (fixed by Linear(256, ld) heads)
LATENT = 32         # args.ld
HEAD = 2 * LATENT   # fused [mu | log_sigma] head width


# ------------------------------ Pallas kernel -------------------------------
def vae_fwd_kernel(
    x_ref,        # (TB, IN_DIM)      bf16 flattened state tile
    we_ref,       # (IN_DIM, HID)     bf16 encoder weight (in x out)
    be_ref,       # (1, HID)          f32  encoder bias
    wh_ref,       # (HID, 2*LATENT)   bf16 fused [mu | log_sigma] head weight
    bh_ref,       # (1, 2*LATENT)     f32  fused head bias
    wd_ref,       # (LATENT, IN_DIM)  bf16 decoder weight
    bd_ref,       # (1, IN_DIM)       f32  decoder bias
    eps_ref,      # (TB, LATENT)      f32  std normal noise
    out_ref,      # (TB, IN_DIM)      f32  decoder output
    musig_ref,    # (TB, 2*LATENT)    f32  [mu | sigma] (lane-dense slab)
):
    # encoder: h = relu(x @ We + be)   (stand-in for injected encoder)
    h = jnp.dot(x_ref[...], we_ref[...], preferred_element_type=jnp.float32)
    h = jnp.maximum(h + be_ref[...], 0.0)

    # fused heads: one matmul producing [mu | log_sigma]
    hm = jnp.dot(h.astype(jnp.bfloat16), wh_ref[...],
                 preferred_element_type=jnp.float32) + bh_ref[...]
    mu = hm[:, :LATENT]
    log_sigma = hm[:, LATENT:]
    sigma = jnp.exp(log_sigma)                 # f32 epilogue (EUP)

    # reparameterization: z = mu + sigma * eps  (f32)
    z = mu + sigma * eps_ref[...]

    # decoder: sigmoid(z @ Wd + bd)    (stand-in for injected decoder)
    y = jnp.dot(z.astype(jnp.bfloat16), wd_ref[...],
                preferred_element_type=jnp.float32) + bd_ref[...]
    out_ref[...] = jax.nn.sigmoid(y)

    # single lane-dense store for the small latent outputs
    musig_ref[...] = jnp.concatenate([mu, sigma], axis=-1)


# ------------------------------ host wrapper --------------------------------
def vae_forward(state_nchw, params, eps):
    """state_nchw: (B, C, H, W) f32; eps: (B, LATENT) f32 -> (recon, mu, sigma)."""
    b = state_nchw.shape[0]
    assert b % TB == 0, "batch must be a multiple of the batch tile"

    # flatten NCHW row-major (same as torch .view) and cast matmul operands
    x = state_nchw.reshape(b, -1).astype(jnp.bfloat16)
    we = params["we"].astype(jnp.bfloat16)
    wh = jnp.concatenate([params["wmu"], params["wls"]], axis=1).astype(jnp.bfloat16)
    bh = jnp.concatenate([params["bmu"], params["bls"]], axis=1)   # f32
    wd = params["wd"].astype(jnp.bfloat16)

    flops = 2 * b * (IN_DIM * HID + HID * HEAD + LATENT * IN_DIM)
    transcendentals = b * (LATENT + IN_DIM)           # exp + sigmoid
    bytes_accessed = (
        x.size * 2 + we.size * 2 + wh.size * 2 + wd.size * 2
        + params["be"].size * 4 + bh.size * 4 + params["bd"].size * 4
        + eps.size * 4 + b * IN_DIM * 4 + b * HEAD * 4
    )

    grid = (b // TB,)
    out, musig = pl.pallas_call(
        vae_fwd_kernel,
        out_shape=(
            jax.ShapeDtypeStruct((b, IN_DIM), jnp.float32),
            jax.ShapeDtypeStruct((b, HEAD), jnp.float32),
        ),
        grid_spec=pltpu.PrefetchScalarGridSpec(
            num_scalar_prefetch=0,
            grid=grid,
            in_specs=[
                pl.BlockSpec((TB, IN_DIM), lambda i: (i, 0)),     # x tile
                pl.BlockSpec((IN_DIM, HID), lambda i: (0, 0)),    # we (resident)
                pl.BlockSpec((1, HID), lambda i: (0, 0)),         # be (resident)
                pl.BlockSpec((HID, HEAD), lambda i: (0, 0)),      # wh (resident)
                pl.BlockSpec((1, HEAD), lambda i: (0, 0)),        # bh (resident)
                pl.BlockSpec((LATENT, IN_DIM), lambda i: (0, 0)), # wd (resident)
                pl.BlockSpec((1, IN_DIM), lambda i: (0, 0)),      # bd (resident)
                pl.BlockSpec((TB, LATENT), lambda i: (i, 0)),     # eps tile
            ],
            out_specs=[
                pl.BlockSpec((TB, IN_DIM), lambda i: (i, 0)),     # recon tile
                pl.BlockSpec((TB, HEAD), lambda i: (i, 0)),       # [mu|sigma] tile
            ],
        ),
        compiler_params=pltpu.CompilerParams(
            dimension_semantics=("parallel",),
        ),
        cost_estimate=pl.CostEstimate(
            flops=flops,
            transcendentals=transcendentals,
            bytes_accessed=bytes_accessed,
        ),
    )(x, we, params["be"], wh, bh, wd, params["bd"], eps)

    recon = out.reshape(b, C, H, W)
    mu = musig[:, :LATENT]
    sigma = musig[:, LATENT:]
    return recon, mu, sigma


def init_params(key):
    """Deterministic parameter init (weights stored as (in, out) = W^T), f32."""
    ks = jax.random.split(key, 8)

    def lin(kw, kb, fan_in, fan_out):
        lim = 1.0 / jnp.sqrt(fan_in)
        w = jax.random.uniform(kw, (fan_in, fan_out), jnp.float32, -lim, lim)
        b = jax.random.uniform(kb, (1, fan_out), jnp.float32, -lim, lim)
        return w, b

    we, be = lin(ks[0], ks[1], IN_DIM, HID)
    wmu, bmu = lin(ks[2], ks[3], HID, LATENT)
    wls, bls = lin(ks[4], ks[5], HID, LATENT)
    wd, bd = lin(ks[6], ks[7], LATENT, IN_DIM)
    return dict(we=we, be=be, wmu=wmu, bmu=bmu, wls=wls, bls=bls, wd=wd, bd=bd)


if __name__ == "__main__":
    root = jax.random.PRNGKey(0)
    k_param, k_state, k_eps = jax.random.split(root, 3)

    params = init_params(k_param)
    state = jax.random.normal(k_state, (BATCH, C, H, W), jnp.float32)
    eps = jax.random.normal(k_eps, (BATCH, LATENT), jnp.float32)  # std_z ~ N(0,1)

    recon, mu, sigma = vae_forward(state, params, eps)
    jax.block_until_ready((recon, mu, sigma))

    # -------- reference in plain JAX with identical bf16 quantization --------
    xb = state.reshape(BATCH, -1).astype(jnp.bfloat16)
    web = params["we"].astype(jnp.bfloat16)
    whb = jnp.concatenate([params["wmu"], params["wls"]], axis=1).astype(jnp.bfloat16)
    bh = jnp.concatenate([params["bmu"], params["bls"]], axis=1)
    wdb = params["wd"].astype(jnp.bfloat16)

    h_ref = jnp.maximum(
        jnp.dot(xb, web, preferred_element_type=jnp.float32) + params["be"], 0.0
    )
    hm_ref = jnp.dot(h_ref.astype(jnp.bfloat16), whb,
                     preferred_element_type=jnp.float32) + bh
    mu_ref = hm_ref[:, :LATENT]
    sig_ref = jnp.exp(hm_ref[:, LATENT:])
    z_ref = mu_ref + sig_ref * eps
    rec_ref = jax.nn.sigmoid(
        jnp.dot(z_ref.astype(jnp.bfloat16), wdb,
                preferred_element_type=jnp.float32) + params["bd"]
    ).reshape(BATCH, C, H, W)

    assert jnp.allclose(recon, rec_ref, atol=1e-2, rtol=1e-2)
    assert jnp.allclose(mu, mu_ref, atol=1e-2, rtol=1e-2)
    assert jnp.allclose(sigma, sig_ref, atol=1e-2, rtol=1e-2)

    print("KERNEL_OK")
</pallas_src>

<mosaic_0001>
module attributes {stable_mosaic.version = 11 : i64} {
  func.func @vae_fwd_kernel(%arg0: i32, %arg1: memref<8x1024xbf16, #tpu.memory_space<vmem>>, %arg2: memref<1024x256xbf16, #tpu.memory_space<vmem>>, %arg3: memref<1x256xf32, #tpu.memory_space<vmem>>, %arg4: memref<256x64xbf16, #tpu.memory_space<vmem>>, %arg5: memref<1x64xf32, #tpu.memory_space<vmem>>, %arg6: memref<32x1024xbf16, #tpu.memory_space<vmem>>, %arg7: memref<1x1024xf32, #tpu.memory_space<vmem>>, %arg8: memref<8x32xf32, #tpu.memory_space<vmem>>, %arg9: memref<8x1024xf32, #tpu.memory_space<vmem>>, %arg10: memref<8x64xf32, #tpu.memory_space<vmem>>) attributes {dimension_semantics = [#tpu.dimension_semantics<parallel>], iteration_bounds = array<i64: 2>, scalar_prefetch = 0 : i64, scratch_operands = 0 : i64, tpu.core_type = #tpu.core_type<tc>, window_params = [{transform_indices = @transform_0, window_bounds = array<i64: 8, 1024>}, {pipeline_mode = #tpu.pipeline_mode<synchronous>, transform_indices = @transform_1, window_bounds = array<i64: 1024, 256>}, {pipeline_mode = #tpu.pipeline_mode<synchronous>, transform_indices = @transform_2, window_bounds = array<i64: 1, 256>}, {pipeline_mode = #tpu.pipeline_mode<synchronous>, transform_indices = @transform_3, window_bounds = array<i64: 256, 64>}, {pipeline_mode = #tpu.pipeline_mode<synchronous>, transform_indices = @transform_4, window_bounds = array<i64: 1, 64>}, {pipeline_mode = #tpu.pipeline_mode<synchronous>, transform_indices = @transform_5, window_bounds = array<i64: 32, 1024>}, {pipeline_mode = #tpu.pipeline_mode<synchronous>, transform_indices = @transform_6, window_bounds = array<i64: 1, 1024>}, {transform_indices = @transform_7, window_bounds = array<i64: 8, 32>}, {transform_indices = @transform_8, window_bounds = array<i64: 8, 1024>}, {transform_indices = @transform_9, window_bounds = array<i64: 8, 64>}]} {
    %c0 = arith.constant 0 : index
    %c0_0 = arith.constant 0 : index
    %0 = vector.load %arg1[%c0, %c0_0] : memref<8x1024xbf16, #tpu.memory_space<vmem>>, vector<8x1024xbf16>
    %c0_1 = arith.constant 0 : index
    %c0_2 = arith.constant 0 : index
    %1 = vector.load %arg2[%c0_1, %c0_2] : memref<1024x256xbf16, #tpu.memory_space<vmem>>, vector<1024x256xbf16>
    %cst = arith.constant dense<0.000000e+00> : vector<8x256xf32>
    %2 = tpu.matmul %0, %1, %cst {dimension_numbers = #tpu.dot_dimension_numbers<[1], [0], [0], [1], [0, 0, 1, 1], [], []>} : vector<8x1024xbf16>, vector<1024x256xbf16>, vector<8x256xf32> -> vector<8x256xf32>
    %c0_3 = arith.constant 0 : index
    %c0_4 = arith.constant 0 : index
    %3 = vector.load %arg3[%c0_3, %c0_4] : memref<1x256xf32, #tpu.memory_space<vmem>>, vector<1x256xf32>
    %4 = vector.broadcast %3 : vector<1x256xf32> to vector<8x256xf32>
    %5 = arith.addf %2, %4 : vector<8x256xf32>
    %cst_5 = arith.constant 0.000000e+00 : f32
    %6 = vector.broadcast %cst_5 : f32 to vector<8x256xf32>
    %7 = arith.maximumf %5, %6 : vector<8x256xf32>
    %8 = arith.truncf %7 : vector<8x256xf32> to vector<8x256xbf16>
    %c0_6 = arith.constant 0 : index
    %c0_7 = arith.constant 0 : index
    %9 = vector.load %arg4[%c0_6, %c0_7] : memref<256x64xbf16, #tpu.memory_space<vmem>>, vector<256x64xbf16>
    %cst_8 = arith.constant dense<0.000000e+00> : vector<8x64xf32>
    %10 = tpu.matmul %8, %9, %cst_8 {dimension_numbers = #tpu.dot_dimension_numbers<[1], [0], [0], [1], [0, 0, 1, 1], [], []>} : vector<8x256xbf16>, vector<256x64xbf16>, vector<8x64xf32> -> vector<8x64xf32>
    %c0_9 = arith.constant 0 : index
    %c0_10 = arith.constant 0 : index
    %11 = vector.load %arg5[%c0_9, %c0_10] : memref<1x64xf32, #tpu.memory_space<vmem>>, vector<1x64xf32>
    %12 = vector.broadcast %11 : vector<1x64xf32> to vector<8x64xf32>
    %13 = arith.addf %10, %12 : vector<8x64xf32>
    %14 = vector.extract_strided_slice %13 {offsets = [0, 0], sizes = [8, 32], strides = [1, 1]} : vector<8x64xf32> to vector<8x32xf32>
    %15 = vector.extract_strided_slice %13 {offsets = [0, 32], sizes = [8, 32], strides = [1, 1]} : vector<8x64xf32> to vector<8x32xf32>
    %16 = math.exp %15 : vector<8x32xf32>
    %c0_11 = arith.constant 0 : index
    %c0_12 = arith.constant 0 : index
    %17 = vector.load %arg8[%c0_11, %c0_12] : memref<8x32xf32, #tpu.memory_space<vmem>>, vector<8x32xf32>
    %18 = arith.mulf %16, %17 : vector<8x32xf32>
    %19 = arith.addf %14, %18 : vector<8x32xf32>
    %20 = arith.truncf %19 : vector<8x32xf32> to vector<8x32xbf16>
    %c0_13 = arith.constant 0 : index
    %c0_14 = arith.constant 0 : index
    %21 = vector.load %arg6[%c0_13, %c0_14] : memref<32x1024xbf16, #tpu.memory_space<vmem>>, vector<32x1024xbf16>
    %cst_15 = arith.constant dense<0.000000e+00> : vector<8x1024xf32>
    %22 = tpu.matmul %20, %21, %cst_15 {dimension_numbers = #tpu.dot_dimension_numbers<[1], [0], [0], [1], [0, 0, 1, 1], [], []>} : vector<8x32xbf16>, vector<32x1024xbf16>, vector<8x1024xf32> -> vector<8x1024xf32>
    %c0_16 = arith.constant 0 : index
    %c0_17 = arith.constant 0 : index
    %23 = vector.load %arg7[%c0_16, %c0_17] : memref<1x1024xf32, #tpu.memory_space<vmem>>, vector<1x1024xf32>
    %24 = vector.broadcast %23 : vector<1x1024xf32> to vector<8x1024xf32>
    %25 = arith.addf %22, %24 : vector<8x1024xf32>
    %26 = arith.negf %25 : vector<8x1024xf32>
    %27 = math.exp %26 : vector<8x1024xf32>
    %cst_18 = arith.constant 1.000000e+00 : f32
    %28 = vector.broadcast %cst_18 : f32 to vector<8x1024xf32>
    %29 = arith.addf %28, %27 : vector<8x1024xf32>
    %30 = arith.divf %28, %29 : vector<8x1024xf32>
    %c0_19 = arith.constant 0 : index
    %c0_20 = arith.constant 0 : index
    %31 = vector.load %arg9[%c0_19, %c0_20] : memref<8x1024xf32, #tpu.memory_space<vmem>>, vector<8x1024xf32>
    tpu.vector_store %arg9[%c0_19, %c0_20], %30 {strides = array<i32>} : memref<8x1024xf32, #tpu.memory_space<vmem>>, vector<8x1024xf32>,
    %32 = tpu.concatenate %14, %16 in 1 : vector<8x32xf32>, vector<8x32xf32> -> vector<8x64xf32>
    %c0_21 = arith.constant 0 : index
    %c0_22 = arith.constant 0 : index
    %33 = vector.load %arg10[%c0_21, %c0_22] : memref<8x64xf32, #tpu.memory_space<vmem>>, vector<8x64xf32>
    tpu.vector_store %arg10[%c0_21, %c0_22], %32 {strides = array<i32>} : memref<8x64xf32, #tpu.memory_space<vmem>>, vector<8x64xf32>,
    return
  }
  func.func @transform_0(%arg0: i32) -> (i32, i32) {
    %c0_i32 = arith.constant 0 : i32
    %c0_i32_0 = arith.constant 0 : i32
    return %arg0, %c0_i32 : i32, i32
  }
  func.func @transform_1(%arg0: i32) -> (i32, i32) {
    %c0_i32 = arith.constant 0 : i32
    %c0_i32_0 = arith.constant 0 : i32
    %c0_i32_1 = arith.constant 0 : i32
    return %c0_i32, %c0_i32_0 : i32, i32
  }
  func.func @transform_2(%arg0: i32) -> (i32, i32) {
    %c0_i32 = arith.constant 0 : i32
    %c0_i32_0 = arith.constant 0 : i32
    %c0_i32_1 = arith.constant 0 : i32
    return %c0_i32, %c0_i32_0 : i32, i32
  }
  func.func @transform_3(%arg0: i32) -> (i32, i32) {
    %c0_i32 = arith.constant 0 : i32
    %c0_i32_0 = arith.constant 0 : i32
    %c0_i32_1 = arith.constant 0 : i32
    return %c0_i32, %c0_i32_0 : i32, i32
  }
  func.func @transform_4(%arg0: i32) -> (i32, i32) {
    %c0_i32 = arith.constant 0 : i32
    %c0_i32_0 = arith.constant 0 : i32
    %c0_i32_1 = arith.constant 0 : i32
    return %c0_i32, %c0_i32_0 : i32, i32
  }
  func.func @transform_5(%arg0: i32) -> (i32, i32) {
    %c0_i32 = arith.constant 0 : i32
    %c0_i32_0 = arith.constant 0 : i32
    %c0_i32_1 = arith.constant 0 : i32
    return %c0_i32, %c0_i32_0 : i32, i32
  }
  func.func @transform_6(%arg0: i32) -> (i32, i32) {
    %c0_i32 = arith.constant 0 : i32
    %c0_i32_0 = arith.constant 0 : i32
    %c0_i32_1 = arith.constant 0 : i32
    return %c0_i32, %c0_i32_0 : i32, i32
  }
  func.func @transform_7(%arg0: i32) -> (i32, i32) {
    %c0_i32 = arith.constant 0 : i32
    %c0_i32_0 = arith.constant 0 : i32
    return %arg0, %c0_i32 : i32, i32
  }
  func.func @transform_8(%arg0: i32) -> (i32, i32) {
    %c0_i32 = arith.constant 0 : i32
    %c0_i32_0 = arith.constant 0 : i32
    return %arg0, %c0_i32 : i32, i32
  }
  func.func @transform_9(%arg0: i32) -> (i32, i32) {
    %c0_i32 = arith.constant 0 : i32
    %c0_i32_0 = arith.constant 0 : i32
    return %arg0, %c0_i32 : i32, i32
  }
}

</mosaic_0001>

<llo_original>
// kernel: tpu_custom_call.1
$region0: #{tpu_custom_call.1}
  #allocation0 [shape = 'u32[]', space=smem, size = 0x4, offset = 0x4, fixed_abs, tag = 'smem constant byte address 0x4 - core index']
  #allocation1 [shape = 'u32[72,128]{1,0:T(1,128)}', space=vmem, size = 0x9000, scoped, tag = 'internal scratch']
  %s0 = inlined_call_operand.vmem [shape: bf16[16,1024], index: 0, kind: input, shape index: {}]
  %s1 = inlined_call_operand.hbm [shape: bf16[1024,256], index: 1, kind: input, shape index: {}]
  %s2 = inlined_call_operand.vmem [shape: f32[1,256], index: 2, kind: input, shape index: {}]
  %s3 = inlined_call_operand.vmem [shape: bf16[256,64], index: 3, kind: input, shape index: {}]
  %s4 = inlined_call_operand.vmem [shape: f32[1,64], index: 4, kind: input, shape index: {}]
  %s5 = inlined_call_operand.vmem [shape: bf16[32,1024], index: 5, kind: input, shape index: {}]
  %s6 = inlined_call_operand.hbm [shape: f32[1,1024], index: 6, kind: input, shape index: {}]
  %s7 = inlined_call_operand.hbm [shape: f32[16,32], index: 7, kind: input, shape index: {}]
  %s8 = inlined_call_operand.hbm [shape: f32[16,1024], index: 8, kind: output, shape index: {0}]
  %s9 = inlined_call_operand.hbm [shape: f32[16,64], index: 9, kind: output, shape index: {1}]
  %10 = xla_tuple %s8, %s9
  %s11 = sld [smem:[#allocation0]]
  $region85: #{tpu_custom_call.1} parent=0
    _
  %s13 = ssub.s32 1, %s11
  %s14 = scalar_select 0, %s13, %s11
  $region1: #{tpu_custom_call.1} parent=0
    #allocation2 [shape = 'u8[524288]{0}', space=vmem, size = 0x80000, scoped, tag = 'input window, operand 1, single buffered']
    #allocation3 [shape = 's32[2]{0}', space=sflag, size = 0x8, scoped, tag = 'scoped memory for tpu_custom_call.1']
    #allocation4 [shape = 's32[2]{0}', space=sflag, size = 0x8, scoped, tag = 'scoped memory for tpu_custom_call.1']
    #allocation5 [shape = 'u8[4096]{0}', space=vmem, size = 0x1000, scoped, tag = 'input window, operand 6, single buffered']
    #allocation6 [shape = 's32[1]{0}', space=sflag, size = 0x4, scoped, tag = 'scoped memory for tpu_custom_call.1']
    #allocation7 [shape = 'u8[8192]{0}', space=vmem, size = 0x2000, scoped, tag = 'input window, operand 7']
    #allocation8 [shape = 'u8[65536]{0}', space=vmem, size = 0x10000, scoped, tag = 'output window, operand 0']
    #allocation9 [shape = 'u8[8192]{0}', space=vmem, size = 0x2000, scoped, tag = 'output window, operand 1']
    #allocation10 [shape = 's32[2]{0}', space=sflag, size = 0x8, scoped, tag = 'scoped memory for tpu_custom_call.1']
    %15 = vsyncpa [#allocation3], 0
    %16 = vsyncpa [#allocation6], 0
    %17 = vsyncpa [#allocation4], 0
    %s18 = scalar_lea.sflag [#allocation4], 1
    %19 = vsyncpa %s18, 0
    %20 = vsyncpa [#allocation10], 0
    %s21 = scalar_lea.sflag [#allocation10], 1
    %22 = vsyncpa %s21, 0
    loop: start=0, step=1, limit=4
    $region2: #{tpu_custom_call.1} parent=1 // loop_pre_header
      _
    $region3: #{tpu_custom_call.1} parent=1 // loop_header
      %s24 = sphi 0, %s28
      %p25 = scmp.ge.s32.totalorder %s24, 4
      %s34 = sphi 0, %s36
      %s37 = sphi 0, %s34
      %s38 = sphi 0, %s37
      %s54 = sphi 0, %s38
      %s58 = sphi 0, %s58
      %s60 = sphi 0, %s58
      %s61 = sphi 0, %s60
      %s75 = sphi 0, %s61
      %s79 = sphi 0, %s79
      %s81 = sphi 0, %s79
      %s82 = sphi 0, %s81
      %s96 = sphi 0, %s82
      %s100 = sphi 0, %s100
      %s102 = sphi 0, %s100
      %s103 = sphi 0, %s102
      %s117 = sphi 0, %s103
      %s121 = sphi 0, %s121
      %s123 = sphi 0, %s121
      %s124 = sphi 0, %s123
      %s138 = sphi 0, %s124
      %s142 = sphi 0, %s142
      %s144 = sphi 0, %s142
      %s145 = sphi 0, %s144
      %s159 = sphi 0, %s145
      %s163 = sphi 0, %s163
      %s165 = sphi 0, %s163
      %s166 = sphi 0, %s165
      %s180 = sphi 0, %s166
      %s186 = sphi 0, %s188
      %s189 = sphi 0, %s186
      %s190 = sphi 0, %s189
      %s206 = sphi 0, %s190
      %s212 = sphi 0, %s214
      %s215 = sphi 0, %s212
      %s216 = sphi 0, %s215
      %s232 = sphi 0, %s216
      %s238 = sphi 0, %s240
      %s241 = sphi 0, %s238
      %s242 = sphi 0, %s241
      %s258 = sphi 0, %s242
    $region4: #{tpu_custom_call.1} parent=1 // loop_header_branch
      %27 = sbr.rel (%p25) target = $region8
    $region5: #{tpu_custom_call.1} parent=1 // loop_body
      %s29 = ssub.s32 %s24, 1
      %s30 = ssub.s32 %s24, 2
      %s31 = sadd.s32 %s24, 1
      %s32 = ssub.s32 %s24, %s31
      %p33 = scmp.eq.s32.totalorder %s32, 0
      %s35 = sadd.s32 %s34, 1
      %s36 = scalar_select %p33, %s34, %s35
      %p39 = pneg %p33
      %p40 = scmp.eq.s32.totalorder %s24, 1
      %p41 = por %p39, %p40
      %p42 = scmp.ne.s32.totalorder %s34, %s37
      %p43 = scmp.eq.s32.totalorder %s24, 0
      %p44 = por %p42, %p43
      %p45 = scmp.ne.s32.totalorder %s34, %s37
      %p46 = scmp.eq.s32.totalorder %s29, 1
      %p47 = por %p45, %p46
      %p48 = scmp.ne.s32.totalorder %s37, %s38
      %p49 = scmp.eq.s32.totalorder %s29, 0
      %p50 = por %p48, %p49
      %p51 = scmp.ne.s32.totalorder %s37, %s38
      %p52 = scmp.eq.s32.totalorder %s30, 1
      %p53 = por %p51, %p52
      %p55 = scmp.ne.s32.totalorder %s38, %s54
      %p56 = scmp.eq.s32.totalorder %s30, 0
      %p57 = por %p55, %p56
      %s59 = sadd.s32 %s58, 1
      %p62 = scmp.eq.s32.totalorder %s24, 1
      %p63 = scmp.ne.s32.totalorder %s58, %s60
      %p64 = scmp.eq.s32.totalorder %s24, 0
      %p65 = por %p63, %p64
      %p66 = scmp.ne.s32.totalorder %s58, %s60
      %p67 = scmp.eq.s32.totalorder %s29, 1
      %p68 = por %p66, %p67
      %p69 = scmp.ne.s32.totalorder %s60, %s61
      %p70 = scmp.eq.s32.totalorder %s29, 0
      %p71 = por %p69, %p70
      %p72 = scmp.ne.s32.totalorder %s60, %s61
      %p73 = scmp.eq.s32.totalorder %s30, 1
      %p74 = por %p72, %p73
      %p76 = scmp.ne.s32.totalorder %s61, %s75
      %p77 = scmp.eq.s32.totalorder %s30, 0
      %p78 = por %p76, %p77
      %s80 = sadd.s32 %s79, 1
      %p83 = scmp.eq.s32.totalorder %s24, 1
      %p84 = scmp.ne.s32.totalorder %s79, %s81
      %p85 = scmp.eq.s32.totalorder %s24, 0
      %p86 = por %p84, %p85
      %p87 = scmp.ne.s32.totalorder %s79, %s81
      %p88 = scmp.eq.s32.totalorder %s29, 1
      %p89 = por %p87, %p88
      %p90 = scmp.ne.s32.totalorder %s81, %s82
      %p91 = scmp.eq.s32.totalorder %s29, 0
      %p92 = por %p90, %p91
      %p93 = scmp.ne.s32.totalorder %s81, %s82
      %p94 = scmp.eq.s32.totalorder %s30, 1
      %p95 = por %p93, %p94
      %p97 = scmp.ne.s32.totalorder %s82, %s96
      %p98 = scmp.eq.s32.totalorder %s30, 0
      %p99 = por %p97, %p98
      %s101 = sadd.s32 %s100, 1
      %p104 = scmp.eq.s32.totalorder %s24, 1
      %p105 = scmp.ne.s32.totalorder %s100, %s102
      %p106 = scmp.eq.s32.totalorder %s24, 0
      %p107 = por %p105, %p106
      %p108 = scmp.ne.s32.totalorder %s100, %s102
      %p109 = scmp.eq.s32.totalorder %s29, 1
      %p110 = por %p108, %p109
      %p111 = scmp.ne.s32.totalorder %s102, %s103
      %p112 = scmp.eq.s32.totalorder %s29, 0
      %p113 = por %p111, %p112
      %p114 = scmp.ne.s32.totalorder %s102, %s103
      %p115 = scmp.eq.s32.totalorder %s30, 1
      %p116 = por %p114, %p115
      %p118 = scmp.ne.s32.totalorder %s103, %s117
      %p119 = scmp.eq.s32.totalorder %s30, 0
      %p120 = por %p118, %p119
      %s122 = sadd.s32 %s121, 1
      %p125 = scmp.eq.s32.totalorder %s24, 1
      %p126 = scmp.ne.s32.totalorder %s121, %s123
      %p127 = scmp.eq.s32.totalorder %s24, 0
      %p128 = por %p126, %p127
      %p129 = scmp.ne.s32.totalorder %s121, %s123
      %p130 = scmp.eq.s32.totalorder %s29, 1
      %p131 = por %p129, %p130
      %p132 = scmp.ne.s32.totalorder %s123, %s124
      %p133 = scmp.eq.s32.totalorder %s29, 0
      %p134 = por %p132, %p133
      %p135 = scmp.ne.s32.totalorder %s123, %s124
      %p136 = scmp.eq.s32.totalorder %s30, 1
      %p137 = por %p135, %p136
      %p139 = scmp.ne.s32.totalorder %s124, %s138
      %p140 = scmp.eq.s32.totalorder %s30, 0
      %p141 = por %p139, %p140
      %s143 = sadd.s32 %s142, 1
      %p146 = scmp.eq.s32.totalorder %s24, 1
      %p147 = scmp.ne.s32.totalorder %s142, %s144
      %p148 = scmp.eq.s32.totalorder %s24, 0
      %p149 = por %p147, %p148
      %p150 = scmp.ne.s32.totalorder %s142, %s144
      %p151 = scmp.eq.s32.totalorder %s29, 1
      %p152 = por %p150, %p151
      %p153 = scmp.ne.s32.totalorder %s144, %s145
      %p154 = scmp.eq.s32.totalorder %s29, 0
      %p155 = por %p153, %p154
      %p156 = scmp.ne.s32.totalorder %s144, %s145
      %p157 = scmp.eq.s32.totalorder %s30, 1
      %p158 = por %p156, %p157
      %p160 = scmp.ne.s32.totalorder %s145, %s159
      %p161 = scmp.eq.s32.totalorder %s30, 0
      %p162 = por %p160, %p161
      %s164 = sadd.s32 %s163, 1
      %p167 = scmp.eq.s32.totalorder %s24, 1
      %p168 = scmp.ne.s32.totalorder %s163, %s165
      %p169 = scmp.eq.s32.totalorder %s24, 0
      %p170 = por %p168, %p169
      %p171 = scmp.ne.s32.totalorder %s163, %s165
      %p172 = scmp.eq.s32.totalorder %s29, 1
      %p173 = por %p171, %p172
      %p174 = scmp.ne.s32.totalorder %s165, %s166
      %p175 = scmp.eq.s32.totalorder %s29, 0
      %p176 = por %p174, %p175
      %p177 = scmp.ne.s32.totalorder %s165, %s166
      %p178 = scmp.eq.s32.totalorder %s30, 1
      %p179 = por %p177, %p178
      %p181 = scmp.ne.s32.totalorder %s166, %s180
      %p182 = scmp.eq.s32.totalorder %s30, 0
      %p183 = por %p181, %p182
      %s184 = ssub.s32 %s24, %s31
      %p185 = scmp.eq.s32.totalorder %s184, 0
      %s187 = sadd.s32 %s186, 1
      %s188 = scalar_select %p185, %s186, %s187
      %p191 = pneg %p185
      %p192 = scmp.eq.s32.totalorder %s24, 1
      %p193 = por %p191, %p192
      %p194 = scmp.ne.s32.totalorder %s186, %s189
      %p195 = scmp.eq.s32.totalorder %s24, 0
      %p196 = por %p194, %p195
      %p197 = scmp.ne.s32.totalorder %s186, %s189
      %p198 = scmp.eq.s32.totalorder %s29, 1
      %p199 = por %p197, %p198
      %p200 = scmp.ne.s32.totalorder %s189, %s190
      %p201 = scmp.eq.s32.totalorder %s29, 0
      %p202 = por %p200, %p201
      %p203 = scmp.ne.s32.totalorder %s189, %s190
      %p204 = scmp.eq.s32.totalorder %s30, 1
      %p205 = por %p203, %p204
      %p207 = scmp.ne.s32.totalorder %s190, %s206
      %p208 = scmp.eq.s32.totalorder %s30, 0
      %p209 = por %p207, %p208
      %s210 = ssub.s32 %s24, %s31
      %p211 = scmp.eq.s32.totalorder %s210, 0
      %s213 = sadd.s32 %s212, 1
      %s214 = scalar_select %p211, %s212, %s213
      %p217 = pneg %p211
      %p218 = scmp.eq.s32.totalorder %s24, 1
      %p219 = por %p217, %p218
      %p220 = scmp.ne.s32.totalorder %s212, %s215
      %p221 = scmp.eq.s32.totalorder %s24, 0
      %p222 = por %p220, %p221
      %p223 = scmp.ne.s32.totalorder %s212, %s215
      %p224 = scmp.eq.s32.totalorder %s29, 1
      %p225 = por %p223, %p224
      %p226 = scmp.ne.s32.totalorder %s215, %s216
      %p227 = scmp.eq.s32.totalorder %s29, 0
      %p228 = por %p226, %p227
      %p229 = scmp.ne.s32.totalorder %s215, %s216
      %p230 = scmp.eq.s32.totalorder %s30, 1
      %p231 = por %p229, %p230
      %p233 = scmp.ne.s32.totalorder %s216, %s232
      %p234 = scmp.eq.s32.totalorder %s30, 0
      %p235 = por %p233, %p234
      %s236 = ssub.s32 %s24, %s31
      %p237 = scmp.eq.s32.totalorder %s236, 0
      %s239 = sadd.s32 %s238, 1
      %s240 = scalar_select %p237, %s238, %s239
      %p243 = pneg %p237
      %p244 = scmp.eq.s32.totalorder %s24, 1
      %p245 = por %p243, %p244
      %p246 = scmp.ne.s32.totalorder %s238, %s241
      %p247 = scmp.eq.s32.totalorder %s24, 0
      %p248 = por %p246, %p247
      %p249 = scmp.ne.s32.totalorder %s238, %s241
      %p250 = scmp.eq.s32.totalorder %s29, 1
      %p251 = por %p249, %p250
      %p252 = scmp.ne.s32.totalorder %s241, %s242
      %p253 = scmp.eq.s32.totalorder %s29, 0
      %p254 = por %p252, %p253
      %p255 = scmp.ne.s32.totalorder %s241, %s242
      %p256 = scmp.eq.s32.totalorder %s30, 1
      %p257 = por %p255, %p256
      %p259 = scmp.ne.s32.totalorder %s242, %s258
      %p260 = scmp.eq.s32.totalorder %s30, 0
      %p261 = por %p259, %p260
      %p262 = scmp.le.s32.totalorder 1, %s24
      %p263 = scmp.lt.s32.totalorder %s24, 3
      %p264 = pnand %p262, %p263
      %p265 = pneg %p264
      // Predicated region
      $region9: #{tpu_custom_call.1} parent=5 // pred_check
        _
      $region10: #{tpu_custom_call.1} parent=5 // pred_check_branch
        %267 = sbr.rel (%p264) target = $region12
      $region11: #{tpu_custom_call.1} parent=5 // pred_region
        %s268 = ssub.s32 %s24, 1
        // Predicated region
        $region13: #{tpu_custom_call.1} parent=11 // pred_check
          %p269 = pneg %p71
        $region14: #{tpu_custom_call.1} parent=11 // pred_check_branch
          %271 = sbr.rel (%p269) target = $region16
        $region15: #{tpu_custom_call.1} parent=11 // pred_region
          %273 = vsyncadd [#allocation3], 0
          %s274 = sshll.u32 %s1, 4
          %s275 = int_to_ptr.hbm [resolvable:$true] %s274
          %s276 = sshll.u32 [#allocation2], 4
          %s277 = int_to_ptr.vmem [resolvable:$true] %s276
          %282 = dma.hbm_to_vmem [thread:$0]  %s275, 16384, %s277, [#allocation3], 128, 128, 8
        $region16: #{tpu_custom_call.1} parent=11 // pred_fallthru
          _
        // Predicated region
        $region17: #{tpu_custom_call.1} parent=11 // pred_check
          %p283 = pneg %p92
        $region18: #{tpu_custom_call.1} parent=11 // pred_check_branch
          %285 = sbr.rel (%p283) target = $region20
        $region19: #{tpu_custom_call.1} parent=11 // pred_region
          _
        $region20: #{tpu_custom_call.1} parent=11 // pred_fallthru
          _
        // Predicated region
        $region21: #{tpu_custom_call.1} parent=11 // pred_check
          %p286 = pneg %p113
        $region22: #{tpu_custom_call.1} parent=11 // pred_check_branch
          %288 = sbr.rel (%p286) target = $region24
        $region23: #{tpu_custom_call.1} parent=11 // pred_region
          _
        $region24: #{tpu_custom_call.1} parent=11 // pred_fallthru
          _
        // Predicated region
        $region25: #{tpu_custom_call.1} parent=11 // pred_check
          %p289 = pneg %p134
        $region26: #{tpu_custom_call.1} parent=11 // pred_check_branch
          %291 = sbr.rel (%p289) target = $region28
        $region27: #{tpu_custom_call.1} parent=11 // pred_region
          _
        $region28: #{tpu_custom_call.1} parent=11 // pred_fallthru
          _
        // Predicated region
        $region29: #{tpu_custom_call.1} parent=11 // pred_check
          %p292 = pneg %p155
        $region30: #{tpu_custom_call.1} parent=11 // pred_check_branch
          %294 = sbr.rel (%p292) target = $region32
        $region31: #{tpu_custom_call.1} parent=11 // pred_region
          _
        $region32: #{tpu_custom_call.1} parent=11 // pred_fallthru
          _
        // Predicated region
        $region33: #{tpu_custom_call.1} parent=11 // pred_check
          %p295 = pneg %p176
        $region34: #{tpu_custom_call.1} parent=11 // pred_check_branch
          %297 = sbr.rel (%p295) target = $region36
        $region35: #{tpu_custom_call.1} parent=11 // pred_region
          %299 = vsyncadd [#allocation6], 0
          %s301 = sshll.u32 %s6, 4
          %s302 = int_to_ptr.hbm [resolvable:$true] %s301
          %s303 = sshll.u32 [#allocation5], 4
          %s304 = int_to_ptr.vmem [resolvable:$true] %s303
          %306 = dma.hbm_to_vmem [thread:$0]  %s302, 128, %s304, [#allocation6]
        $region36: #{tpu_custom_call.1} parent=11 // pred_fallthru
          _
      $region12: #{tpu_custom_call.1} parent=5 // pred_fallthru
        _
      %p307 = scmp.lt.s32.totalorder %s24, 2
      // Predicated region
      $region37: #{tpu_custom_call.1} parent=5 // pred_check
        %p308 = pneg %p307
      $region38: #{tpu_custom_call.1} parent=5 // pred_check_branch
        %310 = sbr.rel (%p308) target = $region40
      $region39: #{tpu_custom_call.1} parent=5 // pred_region
        // Predicated region
        $region41: #{tpu_custom_call.1} parent=39 // pred_check
          %p311 = pneg %p44
        $region42: #{tpu_custom_call.1} parent=39 // pred_check_branch
          %313 = sbr.rel (%p311) target = $region44
        $region43: #{tpu_custom_call.1} parent=39 // pred_region
          %p314 = scmp.lt.s32.totalorder %s24, 1
          %s315 = scalar_select %p314, %s24, 1
          %s316 = smul.addr %s315, 8
          %s317 = smul.addr %s316, 4
          %s318 = scalar_lea.vmem %s0, %s317
        $region44: #{tpu_custom_call.1} parent=39 // pred_fallthru
          _
        // Predicated region
        $region45: #{tpu_custom_call.1} parent=39 // pred_check
          %p319 = pneg %p196
        $region46: #{tpu_custom_call.1} parent=39 // pred_check_branch
          %321 = sbr.rel (%p319) target = $region48
        $region47: #{tpu_custom_call.1} parent=39 // pred_region
          %s322 = sand.u32 %s24, 1
          %s323 = scalar_lea.sflag [#allocation3], %s322
          %s324 = sand.u32 %s186, 1
          %s325 = smul.addr %s324, 8
          %s326 = scalar_lea.vmem [#allocation7], %s325
          %328 = vsyncadd %s323, 0
          %s329 = smul.addr %s24, 8
          %s330 = scalar_lea.hbm %s7, %s329
          %s332 = sshll.u32 %s330, 4
          %s333 = int_to_ptr.hbm [resolvable:$true] %s332
          %s334 = sshll.u32 %s326, 4
          %s335 = int_to_ptr.vmem [resolvable:$true] %s334
          %337 = dma.hbm_to_vmem [thread:$0]  %s333, 128, %s335, %s323
        $region48: #{tpu_custom_call.1} parent=39 // pred_fallthru
          _
      $region40: #{tpu_custom_call.1} parent=5 // pred_fallthru
        _
      %p338 = scmp.le.s32.totalorder 1, %s24
      %p339 = scmp.lt.s32.totalorder %s24, 3
      %p340 = pnand %p338, %p339
      %p341 = pneg %p340
      // Predicated region
      $region49: #{tpu_custom_call.1} parent=5 // pred_check
        _
      $region50: #{tpu_custom_call.1} parent=5 // pred_check_branch
        %343 = sbr.rel (%p340) target = $region52
      $region51: #{tpu_custom_call.1} parent=5 // pred_region
        %s344 = ssub.s32 %s24, 1
        // Predicated region
        $region53: #{tpu_custom_call.1} parent=51 // pred_check
          %p345 = pneg %p71
        $region54: #{tpu_custom_call.1} parent=51 // pred_check_branch
          %347 = sbr.rel (%p345) target = $region56
        $region55: #{tpu_custom_call.1} parent=51 // pred_region
          %349 = dma.done [#allocation3], 16384
        $region56: #{tpu_custom_call.1} parent=51 // pred_fallthru
          _
        // Predicated region
        $region57: #{tpu_custom_call.1} parent=51 // pred_check
          %p350 = pneg %p176
        $region58: #{tpu_custom_call.1} parent=51 // pred_check_branch
          %352 = sbr.rel (%p350) target = $region60
        $region59: #{tpu_custom_call.1} parent=51 // pred_region
          %354 = dma.done [#allocation6], 128
        $region60: #{tpu_custom_call.1} parent=51 // pred_fallthru
          _
        %s355 = sand.u32 %s29, 1
        %s356 = scalar_lea.sflag [#allocation3], %s355
        %s357 = sand.u32 %s189, 1
        %s358 = smul.addr %s357, 8
        %s359 = scalar_lea.vmem [#allocation7], %s358
        // Predicated region
        $region61: #{tpu_custom_call.1} parent=51 // pred_check
          %p360 = pneg %p202
        $region62: #{tpu_custom_call.1} parent=51 // pred_check_branch
          %362 = sbr.rel (%p360) target = $region64
        $region63: #{tpu_custom_call.1} parent=51 // pred_region
          %364 = dma.done %s356, 128
        $region64: #{tpu_custom_call.1} parent=51 // pred_fallthru
          _
        %p365 = scmp.lt.s32.totalorder %s29, 1
        %s366 = scalar_select %p365, %s29, 1
        %s367 = smul.addr %s366, 8
        %s368 = smul.addr %s367, 4
        %s369 = scalar_lea.vmem %s0, %s368
        %p370 = pneg %p50
        %p371 = pneg %p47
        %p372 = pneg %p71
        %p373 = pneg %p68
        %p374 = pneg %p92
        %p375 = pneg %p89
        %p376 = pneg %p113
        %p377 = pneg %p110
        %p378 = pneg %p134
        %p379 = pneg %p131
        %p380 = pneg %p155
        %p381 = pneg %p152
        %p382 = pneg %p176
        %p383 = pneg %p173
        %s384 = sand.u32 %s29, 1
        %s385 = scalar_lea.sflag [#allocation3], %s384
        %s386 = sand.u32 %s189, 1
        %s387 = smul.addr %s386, 8
        %s388 = scalar_lea.vmem [#allocation7], %s387
        %p389 = pneg %p202
        %p390 = pneg %p199
        %p391 = pneg %p228
        %p392 = pneg %p225
        %s393 = sand.u32 %s215, 1
        %s394 = scalar_lea.sflag [#allocation4], %s393
        %s395 = sand.u32 %s215, 1
        %s396 = smul.addr %s395, 64
        %s397 = scalar_lea.vmem [#allocation8], %s396
        %p398 = pneg %p254
        %p399 = pneg %p251
        %s400 = sand.u32 %s241, 1
        %s401 = scalar_lea.sflag [#allocation10], %s400
        %s402 = sand.u32 %s241, 1
        %s403 = smul.addr %s402, 8
        %s404 = scalar_lea.vmem [#allocation9], %s403
        %p405 = scmp.lt.s32.totalorder %s29, 1
        %s406 = scalar_select %p405, %s29, 1
        %s407 = smul.addr %s406, 8
        %s408 = smul.addr %s407, 4
        %s409 = scalar_lea.vmem %s0, %s408
        %v411 = vld [vmem:[%s409] sm:$0xff]
        %v412 = vld [vmem:[%s409 + $0x8] sm:$0xff]
        %v413 = vld [vmem:[%s409 + $0x10] sm:$0xff]
        %v414 = vld [vmem:[%s409 + $0x18] sm:$0xff]
        %v415 = vld [vmem:[#allocation2] sm:$0xff]
        %v416 = vld [vmem:[#allocation2 + $0x8] sm:$0xff]
        %v417 = vld [vmem:[#allocation2 + $0x10] sm:$0xff]
        %v418 = vld [vmem:[#allocation2 + $0x18] sm:$0xff]
        %v419 = vld [vmem:[#allocation2 + $0x20] sm:$0xff]
        %v420 = vld [vmem:[#allocation2 + $0x28] sm:$0xff]
        %v421 = vld [vmem:[#allocation2 + $0x30] sm:$0xff]
        %v422 = vld [vmem:[#allocation2 + $0x38] sm:$0xff]
        %v423 = vld [vmem:[#allocation2 + $0x40] sm:$0xff]
        %v424 = vld [vmem:[#allocation2 + $0x48] sm:$0xff]
        %v425 = vld [vmem:[#allocation2 + $0x50] sm:$0xff]
        %v426 = vld [vmem:[#allocation2 + $0x58] sm:$0xff]
        %v427 = vld [vmem:[#allocation2 + $0x60] sm:$0xff]
        %v428 = vld [vmem:[#allocation2 + $0x68] sm:$0xff]
        %v429 = vld [vmem:[#allocation2 + $0x70] sm:$0xff]
        %v430 = vld [vmem:[#allocation2 + $0x78] sm:$0xff]
        %v431 = vld [vmem:[#allocation2 + $0x80] sm:$0xff]
        %v432 = vld [vmem:[#allocation2 + $0x88] sm:$0xff]
        %v433 = vld [vmem:[#allocation2 + $0x90] sm:$0xff]
        %v434 = vld [vmem:[#allocation2 + $0x98] sm:$0xff]
        %v435 = vld [vmem:[#allocation2 + $0xa0] sm:$0xff]
        %v436 = vld [vmem:[#allocation2 + $0xa8] sm:$0xff]
        %v437 = vld [vmem:[#allocation2 + $0xb0] sm:$0xff]
        %v438 = vld [vmem:[#allocation2 + $0xb8] sm:$0xff]
        %v439 = vld [vmem:[#allocation2 + $0xc0] sm:$0xff]
        %v440 = vld [vmem:[#allocation2 + $0xc8] sm:$0xff]
        %v441 = vld [vmem:[#allocation2 + $0xd0] sm:$0xff]
        %v442 = vld [vmem:[#allocation2 + $0xd8] sm:$0xff]
        %v443 = vld [vmem:[#allocation2 + $0xe0] sm:$0xff]
        %v444 = vld [vmem:[#allocation2 + $0xe8] sm:$0xff]
        %v445 = vld [vmem:[#allocation2 + $0xf0] sm:$0xff]
        %v446 = vld [vmem:[#allocation2 + $0xf8] sm:$0xff]
        %v447 = vld [vmem:[#allocation2 + $0x100] sm:$0xff]
        %v448 = vld [vmem:[#allocation2 + $0x108] sm:$0xff]
        %v449 = vld [vmem:[#allocation2 + $0x110] sm:$0xff]
        %v450 = vld [vmem:[#allocation2 + $0x118] sm:$0xff]
        %v451 = vld [vmem:[#allocation2 + $0x120] sm:$0xff]
        %v452 = vld [vmem:[#allocation2 + $0x128] sm:$0xff]
        %v453 = vld [vmem:[#allocation2 + $0x130] sm:$0xff]
        %v454 = vld [vmem:[#allocation2 + $0x138] sm:$0xff]
        %v455 = vld [vmem:[#allocation2 + $0x140] sm:$0xff]
        %v456 = vld [vmem:[#allocation2 + $0x148] sm:$0xff]
        %v457 = vld [vmem:[#allocation2 + $0x150] sm:$0xff]
        %v458 = vld [vmem:[#allocation2 + $0x158] sm:$0xff]
        %v459 = vld [vmem:[#allocation2 + $0x160] sm:$0xff]
        %v460 = vld [vmem:[#allocation2 + $0x168] sm:$0xff]
        %v461 = vld [vmem:[#allocation2 + $0x170] sm:$0xff]
        %v462 = vld [vmem:[#allocation2 + $0x178] sm:$0xff]
        %v463 = vld [vmem:[#allocation2 + $0x180] sm:$0xff]
        %v464 = vld [vmem:[#allocation2 + $0x188] sm:$0xff]
        %v465 = vld [vmem:[#allocation2 + $0x190] sm:$0xff]
        %v466 = vld [vmem:[#allocation2 + $0x198] sm:$0xff]
        %v467 = vld [vmem:[#allocation2 + $0x1a0] sm:$0xff]
        %v468 = vld [vmem:[#allocation2 + $0x1a8] sm:$0xff]
        %v469 = vld [vmem:[#allocation2 + $0x1b0] sm:$0xff]
        %v470 = vld [vmem:[#allocation2 + $0x1b8] sm:$0xff]
        %v471 = vld [vmem:[#allocation2 + $0x1c0] sm:$0xff]
        %v472 = vld [vmem:[#allocation2 + $0x1c8] sm:$0xff]
        %v473 = vld [vmem:[#allocation2 + $0x1d0] sm:$0xff]
        %v474 = vld [vmem:[#allocation2 + $0x1d8] sm:$0xff]
        %v475 = vld [vmem:[#allocation2 + $0x1e0] sm:$0xff]
        %v476 = vld [vmem:[#allocation2 + $0x1e8] sm:$0xff]
        %v477 = vld [vmem:[#allocation2 + $0x1f0] sm:$0xff]
        %v478 = vld [vmem:[#allocation2 + $0x1f8] sm:$0xff]
        %v479 = vld [vmem:[#allocation2 + $0x200] sm:$0xff]
        %v480 = vld [vmem:[#allocation2 + $0x208] sm:$0xff]
        %v481 = vld [vmem:[#allocation2 + $0x210] sm:$0xff]
        %v482 = vld [vmem:[#allocation2 + $0x218] sm:$0xff]
        %v483 = vld [vmem:[#allocation2 + $0x220] sm:$0xff]
        %v484 = vld [vmem:[#allocation2 + $0x228] sm:$0xff]
        %v485 = vld [vmem:[#allocation2 + $0x230] sm:$0xff]
        %v486 = vld [vmem:[#allocation2 + $0x238] sm:$0xff]
        %v487 = vld [vmem:[#allocation2 + $0x240] sm:$0xff]
        %v488 = vld [vmem:[#allocation2 + $0x248] sm:$0xff]
        %v489 = vld [vmem:[#allocation2 + $0x250] sm:$0xff]
        %v490 = vld [vmem:[#allocation2 + $0x258] sm:$0xff]
        %v491 = vld [vmem:[#allocation2 + $0x260] sm:$0xff]
        %v492 = vld [vmem:[#allocation2 + $0x268] sm:$0xff]
        %v493 = vld [vmem:[#allocation2 + $0x270] sm:$0xff]
        %v494 = vld [vmem:[#allocation2 + $0x278] sm:$0xff]
        %v495 = vld [vmem:[#allocation2 + $0x280] sm:$0xff]
        %v496 = vld [vmem:[#allocation2 + $0x288] sm:$0xff]
        %v497 = vld [vmem:[#allocation2 + $0x290] sm:$0xff]
        %v498 = vld [vmem:[#allocation2 + $0x298] sm:$0xff]
        %v499 = vld [vmem:[#allocation2 + $0x2a0] sm:$0xff]
        %v500 = vld [vmem:[#allocation2 + $0x2a8] sm:$0xff]
        %v501 = vld [vmem:[#allocation2 + $0x2b0] sm:$0xff]
        %v502 = vld [vmem:[#allocation2 + $0x2b8] sm:$0xff]
        %v503 = vld [vmem:[#allocation2 + $0x2c0] sm:$0xff]
        %v504 = vld [vmem:[#allocation2 + $0x2c8] sm:$0xff]
        %v505 = vld [vmem:[#allocation2 + $0x2d0] sm:$0xff]
        %v506 = vld [vmem:[#allocation2 + $0x2d8] sm:$0xff]
        %v507 = vld [vmem:[#allocation2 + $0x2e0] sm:$0xff]
        %v508 = vld [vmem:[#allocation2 + $0x2e8] sm:$0xff]
        %v509 = vld [vmem:[#allocation2 + $0x2f0] sm:$0xff]
        %v510 = vld [vmem:[#allocation2 + $0x2f8] sm:$0xff]
        %v511 = vld [vmem:[#allocation2 + $0x300] sm:$0xff]
        %v512 = vld [vmem:[#allocation2 + $0x308] sm:$0xff]
        %v513 = vld [vmem:[#allocation2 + $0x310] sm:$0xff]
        %v514 = vld [vmem:[#allocation2 + $0x318] sm:$0xff]
        %v515 = vld [vmem:[#allocation2 + $0x320] sm:$0xff]
        %v516 = vld [vmem:[#allocation2 + $0x328] sm:$0xff]
        %v517 = vld [vmem:[#allocation2 + $0x330] sm:$0xff]
        %v518 = vld [vmem:[#allocation2 + $0x338] sm:$0xff]
        %v519 = vld [vmem:[#allocation2 + $0x340] sm:$0xff]
        %v520 = vld [vmem:[#allocation2 + $0x348] sm:$0xff]
        %v521 = vld [vmem:[#allocation2 + $0x350] sm:$0xff]
        %v522 = vld [vmem:[#allocation2 + $0x358] sm:$0xff]
        %v523 = vld [vmem:[#allocation2 + $0x360] sm:$0xff]
        %v524 = vld [vmem:[#allocation2 + $0x368] sm:$0xff]
        %v525 = vld [vmem:[#allocation2 + $0x370] sm:$0xff]
        %v526 = vld [vmem:[#allocation2 + $0x378] sm:$0xff]
        %v527 = vld [vmem:[#allocation2 + $0x380] sm:$0xff]
        %v528 = vld [vmem:[#allocation2 + $0x388] sm:$0xff]
        %v529 = vld [vmem:[#allocation2 + $0x390] sm:$0xff]
        %v530 = vld [vmem:[#allocation2 + $0x398] sm:$0xff]
        %v531 = vld [vmem:[#allocation2 + $0x3a0] sm:$0xff]
        %v532 = vld [vmem:[#allocation2 + $0x3a8] sm:$0xff]
        %v533 = vld [vmem:[#allocation2 + $0x3b0] sm:$0xff]
        %v534 = vld [vmem:[#allocation2 + $0x3b8] sm:$0xff]
        %v535 = vld [vmem:[#allocation2 + $0x3c0] sm:$0xff]
        %v536 = vld [vmem:[#allocation2 + $0x3c8] sm:$0xff]
        %v537 = vld [vmem:[#allocation2 + $0x3d0] sm:$0xff]
        %v538 = vld [vmem:[#allocation2 + $0x3d8] sm:$0xff]
        %v539 = vld [vmem:[#allocation2 + $0x3e0] sm:$0xff]
        %v540 = vld [vmem:[#allocation2 + $0x3e8] sm:$0xff]
        %v541 = vld [vmem:[#allocation2 + $0x3f0] sm:$0xff]
        %v542 = vld [vmem:[#allocation2 + $0x3f8] sm:$0xff]
        %v543 = vld [vmem:[%s2] sm:$0x3]
        %v545 = vperm.slane %v543, 0
        %v546 = vperm.slane %v543, 1
        %v553 = vunpack.c.l.b16 %v411
        %v554 = vunpack.c.h.b16 %v411
        %v555 = vunpack.c.l.b16 %v412
        %v556 = vunpack.c.h.b16 %v412
        %v557 = vunpack.c.l.b16 %v413
        %v558 = vunpack.c.h.b16 %v413
        %v559 = vunpack.c.l.b16 %v414
        %v560 = vunpack.c.h.b16 %v414
        %v561 = vpack.c.b16 %v553, %v553
        %v562 = vpack.c.b16 %v554, %v554
        %v563 = vpack.c.b16 %v555, %v555
        %v564 = vpack.c.b16 %v556, %v556
        %v565 = vpack.c.b16 %v557, %v557
        %v566 = vpack.c.b16 %v558, %v558
        %v567 = vpack.c.b16 %v559, %v559
        %v568 = vpack.c.b16 %v560, %v560
        %v705 = vunpack.c.l.b16 %v415
        %v706 = vunpack.c.h.b16 %v415
        %v707 = vunpack.c.l.b16 %v416
        %v708 = vunpack.c.h.b16 %v416
        %v709 = vunpack.c.l.b16 %v417
        %v710 = vunpack.c.h.b16 %v417
        %v711 = vunpack.c.l.b16 %v418
        %v712 = vunpack.c.h.b16 %v418
        %v713 = vunpack.c.l.b16 %v419
        %v714 = vunpack.c.h.b16 %v419
        %v715 = vunpack.c.l.b16 %v420
        %v716 = vunpack.c.h.b16 %v420
        %v717 = vunpack.c.l.b16 %v421
        %v718 = vunpack.c.h.b16 %v421
        %v719 = vunpack.c.l.b16 %v422
        %v720 = vunpack.c.h.b16 %v422
        %v721 = vunpack.c.l.b16 %v423
        %v722 = vunpack.c.h.b16 %v423
        %v723 = vunpack.c.l.b16 %v424
        %v724 = vunpack.c.h.b16 %v424
        %v725 = vunpack.c.l.b16 %v425
        %v726 = vunpack.c.h.b16 %v425
        %v727 = vunpack.c.l.b16 %v426
        %v728 = vunpack.c.h.b16 %v426
        %v729 = vunpack.c.l.b16 %v427
        %v730 = vunpack.c.h.b16 %v427
        %v731 = vunpack.c.l.b16 %v428
        %v732 = vunpack.c.h.b16 %v428
        %v733 = vunpack.c.l.b16 %v429
        %v734 = vunpack.c.h.b16 %v429
        %v735 = vunpack.c.l.b16 %v430
        %v736 = vunpack.c.h.b16 %v430
        %v737 = vunpack.c.l.b16 %v431
        %v738 = vunpack.c.h.b16 %v431
        %v739 = vunpack.c.l.b16 %v432
        %v740 = vunpack.c.h.b16 %v432
        %v741 = vunpack.c.l.b16 %v433
        %v742 = vunpack.c.h.b16 %v433
        %v743 = vunpack.c.l.b16 %v434
        %v744 = vunpack.c.h.b16 %v434
        %v745 = vunpack.c.l.b16 %v435
        %v746 = vunpack.c.h.b16 %v435
        %v747 = vunpack.c.l.b16 %v436
        %v748 = vunpack.c.h.b16 %v436
        %v749 = vunpack.c.l.b16 %v437
        %v750 = vunpack.c.h.b16 %v437
        %v751 = vunpack.c.l.b16 %v438
        %v752 = vunpack.c.h.b16 %v438
        %v753 = vunpack.c.l.b16 %v439
        %v754 = vunpack.c.h.b16 %v439
        %v755 = vunpack.c.l.b16 %v440
        %v756 = vunpack.c.h.b16 %v440
        %v757 = vunpack.c.l.b16 %v441
        %v758 = vunpack.c.h.b16 %v441
        %v759 = vunpack.c.l.b16 %v442
        %v760 = vunpack.c.h.b16 %v442
        %v761 = vunpack.c.l.b16 %v443
        %v762 = vunpack.c.h.b16 %v443
        %v763 = vunpack.c.l.b16 %v444
        %v764 = vunpack.c.h.b16 %v444
        %v765 = vunpack.c.l.b16 %v445
        %v766 = vunpack.c.h.b16 %v445
        %v767 = vunpack.c.l.b16 %v446
        %v768 = vunpack.c.h.b16 %v446
        %v769 = vunpack.c.l.b16 %v447
        %v770 = vunpack.c.h.b16 %v447
        %v771 = vunpack.c.l.b16 %v448
        %v772 = vunpack.c.h.b16 %v448
        %v773 = vunpack.c.l.b16 %v449
        %v774 = vunpack.c.h.b16 %v449
        %v775 = vunpack.c.l.b16 %v450
        %v776 = vunpack.c.h.b16 %v450
        %v777 = vunpack.c.l.b16 %v451
        %v778 = vunpack.c.h.b16 %v451
        %v779 = vunpack.c.l.b16 %v452
        %v780 = vunpack.c.h.b16 %v452
        %v781 = vunpack.c.l.b16 %v453
        %v782 = vunpack.c.h.b16 %v453
        %v783 = vunpack.c.l.b16 %v454
        %v784 = vunpack.c.h.b16 %v454
        %v785 = vunpack.c.l.b16 %v455
        %v786 = vunpack.c.h.b16 %v455
        %v787 = vunpack.c.l.b16 %v456
        %v788 = vunpack.c.h.b16 %v456
        %v789 = vunpack.c.l.b16 %v457
        %v790 = vunpack.c.h.b16 %v457
        %v791 = vunpack.c.l.b16 %v458
        %v792 = vunpack.c.h.b16 %v458
        %v793 = vunpack.c.l.b16 %v459
        %v794 = vunpack.c.h.b16 %v459
        %v795 = vunpack.c.l.b16 %v460
        %v796 = vunpack.c.h.b16 %v460
        %v797 = vunpack.c.l.b16 %v461
        %v798 = vunpack.c.h.b16 %v461
        %v799 = vunpack.c.l.b16 %v462
        %v800 = vunpack.c.h.b16 %v462
        %v801 = vunpack.c.l.b16 %v463
        %v802 = vunpack.c.h.b16 %v463
        %v803 = vunpack.c.l.b16 %v464
        %v804 = vunpack.c.h.b16 %v464
        %v805 = vunpack.c.l.b16 %v465
        %v806 = vunpack.c.h.b16 %v465
        %v807 = vunpack.c.l.b16 %v466
        %v808 = vunpack.c.h.b16 %v466
        %v809 = vunpack.c.l.b16 %v467
        %v810 = vunpack.c.h.b16 %v467
        %v811 = vunpack.c.l.b16 %v468
        %v812 = vunpack.c.h.b16 %v468
        %v813 = vunpack.c.l.b16 %v469
        %v814 = vunpack.c.h.b16 %v469
        %v815 = vunpack.c.l.b16 %v470
        %v816 = vunpack.c.h.b16 %v470
        %v817 = vunpack.c.l.b16 %v471
        %v818 = vunpack.c.h.b16 %v471
        %v819 = vunpack.c.l.b16 %v472
        %v820 = vunpack.c.h.b16 %v472
        %v821 = vunpack.c.l.b16 %v473
        %v822 = vunpack.c.h.b16 %v473
        %v823 = vunpack.c.l.b16 %v474
        %v824 = vunpack.c.h.b16 %v474
        %v825 = vunpack.c.l.b16 %v475
        %v826 = vunpack.c.h.b16 %v475
        %v827 = vunpack.c.l.b16 %v476
        %v828 = vunpack.c.h.b16 %v476
        %v829 = vunpack.c.l.b16 %v477
        %v830 = vunpack.c.h.b16 %v477
        %v831 = vunpack.c.l.b16 %v478
        %v832 = vunpack.c.h.b16 %v478
        %v833 = vunpack.c.l.b16 %v479
        %v834 = vunpack.c.h.b16 %v479
        %v835 = vunpack.c.l.b16 %v480
        %v836 = vunpack.c.h.b16 %v480
        %v837 = vunpack.c.l.b16 %v481
        %v838 = vunpack.c.h.b16 %v481
        %v839 = vunpack.c.l.b16 %v482
        %v840 = vunpack.c.h.b16 %v482
        %v841 = vunpack.c.l.b16 %v483
        %v842 = vunpack.c.h.b16 %v483
        %v843 = vunpack.c.l.b16 %v484
        %v844 = vunpack.c.h.b16 %v484
        %v845 = vunpack.c.l.b16 %v485
        %v846 = vunpack.c.h.b16 %v485
        %v847 = vunpack.c.l.b16 %v486
        %v848 = vunpack.c.h.b16 %v486
        %v849 = vunpack.c.l.b16 %v487
        %v850 = vunpack.c.h.b16 %v487
        %v851 = vunpack.c.l.b16 %v488
        %v852 = vunpack.c.h.b16 %v488
        %v853 = vunpack.c.l.b16 %v489
        %v854 = vunpack.c.h.b16 %v489
        %v855 = vunpack.c.l.b16 %v490
        %v856 = vunpack.c.h.b16 %v490
        %v857 = vunpack.c.l.b16 %v491
        %v858 = vunpack.c.h.b16 %v491
        %v859 = vunpack.c.l.b16 %v492
        %v860 = vunpack.c.h.b16 %v492
        %v861 = vunpack.c.l.b16 %v493
        %v862 = vunpack.c.h.b16 %v493
        %v863 = vunpack.c.l.b16 %v494
        %v864 = vunpack.c.h.b16 %v494
        %v865 = vunpack.c.l.b16 %v495
        %v866 = vunpack.c.h.b16 %v495
        %v867 = vunpack.c.l.b16 %v496
        %v868 = vunpack.c.h.b16 %v496
        %v869 = vunpack.c.l.b16 %v497
        %v870 = vunpack.c.h.b16 %v497
        %v871 = vunpack.c.l.b16 %v498
        %v872 = vunpack.c.h.b16 %v498
        %v873 = vunpack.c.l.b16 %v499
        %v874 = vunpack.c.h.b16 %v499
        %v875 = vunpack.c.l.b16 %v500
        %v876 = vunpack.c.h.b16 %v500
        %v877 = vunpack.c.l.b16 %v501
        %v878 = vunpack.c.h.b16 %v501
        %v879 = vunpack.c.l.b16 %v502
        %v880 = vunpack.c.h.b16 %v502
        %v881 = vunpack.c.l.b16 %v503
        %v882 = vunpack.c.h.b16 %v503
        %v883 = vunpack.c.l.b16 %v504
        %v884 = vunpack.c.h.b16 %v504
        %v885 = vunpack.c.l.b16 %v505
        %v886 = vunpack.c.h.b16 %v505
        %v887 = vunpack.c.l.b16 %v506
        %v888 = vunpack.c.h.b16 %v506
        %v889 = vunpack.c.l.b16 %v507
        %v890 = vunpack.c.h.b16 %v507
        %v891 = vunpack.c.l.b16 %v508
        %v892 = vunpack.c.h.b16 %v508
        %v893 = vunpack.c.l.b16 %v509
        %v894 = vunpack.c.h.b16 %v509
        %v895 = vunpack.c.l.b16 %v510
        %v896 = vunpack.c.h.b16 %v510
        %v897 = vunpack.c.l.b16 %v511
        %v898 = vunpack.c.h.b16 %v511
        %v899 = vunpack.c.l.b16 %v512
        %v900 = vunpack.c.h.b16 %v512
        %v901 = vunpack.c.l.b16 %v513
        %v902 = vunpack.c.h.b16 %v513
        %v903 = vunpack.c.l.b16 %v514
        %v904 = vunpack.c.h.b16 %v514
        %v905 = vunpack.c.l.b16 %v515
        %v906 = vunpack.c.h.b16 %v515
        %v907 = vunpack.c.l.b16 %v516
        %v908 = vunpack.c.h.b16 %v516
        %v909 = vunpack.c.l.b16 %v517
        %v910 = vunpack.c.h.b16 %v517
        %v911 = vunpack.c.l.b16 %v518
        %v912 = vunpack.c.h.b16 %v518
        %v913 = vunpack.c.l.b16 %v519
        %v914 = vunpack.c.h.b16 %v519
        %v915 = vunpack.c.l.b16 %v520
        %v916 = vunpack.c.h.b16 %v520
        %v917 = vunpack.c.l.b16 %v521
        %v918 = vunpack.c.h.b16 %v521
        %v919 = vunpack.c.l.b16 %v522
        %v920 = vunpack.c.h.b16 %v522
        %v921 = vunpack.c.l.b16 %v523
        %v922 = vunpack.c.h.b16 %v523
        %v923 = vunpack.c.l.b16 %v524
        %v924 = vunpack.c.h.b16 %v524
        %v925 = vunpack.c.l.b16 %v525
        %v926 = vunpack.c.h.b16 %v525
        %v927 = vunpack.c.l.b16 %v526
        %v928 = vunpack.c.h.b16 %v526
        %v929 = vunpack.c.l.b16 %v527
        %v930 = vunpack.c.h.b16 %v527
        %v931 = vunpack.c.l.b16 %v528
        %v932 = vunpack.c.h.b16 %v528
        %v933 = vunpack.c.l.b16 %v529
        %v934 = vunpack.c.h.b16 %v529
        %v935 = vunpack.c.l.b16 %v530
        %v936 = vunpack.c.h.b16 %v530
        %v937 = vunpack.c.l.b16 %v531
        %v938 = vunpack.c.h.b16 %v531
        %v939 = vunpack.c.l.b16 %v532
        %v940 = vunpack.c.h.b16 %v532
        %v941 = vunpack.c.l.b16 %v533
        %v942 = vunpack.c.h.b16 %v533
        %v943 = vunpack.c.l.b16 %v534
        %v944 = vunpack.c.h.b16 %v534
        %v945 = vunpack.c.l.b16 %v535
        %v946 = vunpack.c.h.b16 %v535
        %v947 = vunpack.c.l.b16 %v536
        %v948 = vunpack.c.h.b16 %v536
        %v949 = vunpack.c.l.b16 %v537
        %v950 = vunpack.c.h.b16 %v537
        %v951 = vunpack.c.l.b16 %v538
        %v952 = vunpack.c.h.b16 %v538
        %v953 = vunpack.c.l.b16 %v539
        %v954 = vunpack.c.h.b16 %v539
        %v955 = vunpack.c.l.b16 %v540
        %v956 = vunpack.c.h.b16 %v540
        %v957 = vunpack.c.l.b16 %v541
        %v958 = vunpack.c.h.b16 %v541
        %v959 = vunpack.c.l.b16 %v542
        %v960 = vunpack.c.h.b16 %v542
        %v961 = vpack.c.b16 %v707, %v705
        %v962 = vpack.c.b16 %v708, %v706
        %v963 = vpack.c.b16 %v711, %v709
        %v964 = vpack.c.b16 %v712, %v710
        %v965 = vpack.c.b16 %v715, %v713
        %v966 = vpack.c.b16 %v716, %v714
        %v967 = vpack.c.b16 %v719, %v717
        %v968 = vpack.c.b16 %v720, %v718
        %v969 = vpack.c.b16 %v723, %v721
        %v970 = vpack.c.b16 %v724, %v722
        %v971 = vpack.c.b16 %v727, %v725
        %v972 = vpack.c.b16 %v728, %v726
        %v973 = vpack.c.b16 %v731, %v729
        %v974 = vpack.c.b16 %v732, %v730
        %v975 = vpack.c.b16 %v735, %v733
        %v976 = vpack.c.b16 %v736, %v734
        %v977 = vpack.c.b16 %v739, %v737
        %v978 = vpack.c.b16 %v740, %v738
        %v979 = vpack.c.b16 %v743, %v741
        %v980 = vpack.c.b16 %v744, %v742
        %v981 = vpack.c.b16 %v747, %v745
        %v982 = vpack.c.b16 %v748, %v746
        %v983 = vpack.c.b16 %v751, %v749
        %v984 = vpack.c.b16 %v752, %v750
        %v985 = vpack.c.b16 %v755, %v753
        %v986 = vpack.c.b16 %v756, %v754
        %v987 = vpack.c.b16 %v759, %v757
        %v988 = vpack.c.b16 %v760, %v758
        %v989 = vpack.c.b16 %v763, %v761
        %v990 = vpack.c.b16 %v764, %v762
        %v991 = vpack.c.b16 %v767, %v765
        %v992 = vpack.c.b16 %v768, %v766
        %v993 = vpack.c.b16 %v771, %v769
        %v994 = vpack.c.b16 %v772, %v770
        %v995 = vpack.c.b16 %v775, %v773
        %v996 = vpack.c.b16 %v776, %v774
        %v997 = vpack.c.b16 %v779, %v777
        %v998 = vpack.c.b16 %v780, %v778
        %v999 = vpack.c.b16 %v783, %v781
        %v1000 = vpack.c.b16 %v784, %v782
        %v1001 = vpack.c.b16 %v787, %v785
        %v1002 = vpack.c.b16 %v788, %v786
        %v1003 = vpack.c.b16 %v791, %v789
        %v1004 = vpack.c.b16 %v792, %v790
        %v1005 = vpack.c.b16 %v795, %v793
        %v1006 = vpack.c.b16 %v796, %v794
        %v1007 = vpack.c.b16 %v799, %v797
        %v1008 = vpack.c.b16 %v800, %v798
        %v1009 = vpack.c.b16 %v803, %v801
        %v1010 = vpack.c.b16 %v804, %v802
        %v1011 = vpack.c.b16 %v807, %v805
        %v1012 = vpack.c.b16 %v808, %v806
        %v1013 = vpack.c.b16 %v811, %v809
        %v1014 = vpack.c.b16 %v812, %v810
        %v1015 = vpack.c.b16 %v815, %v813
        %v1016 = vpack.c.b16 %v816, %v814
        %v1017 = vpack.c.b16 %v819, %v817
        %v1018 = vpack.c.b16 %v820, %v818
        %v1019 = vpack.c.b16 %v823, %v821
        %v1020 = vpack.c.b16 %v824, %v822
        %v1021 = vpack.c.b16 %v827, %v825
        %v1022 = vpack.c.b16 %v828, %v826
        %v1023 = vpack.c.b16 %v831, %v829
        %v1024 = vpack.c.b16 %v832, %v830
        %v1025 = vpack.c.b16 %v835, %v833
        %v1026 = vpack.c.b16 %v836, %v834
        %v1027 = vpack.c.b16 %v839, %v837
        %v1028 = vpack.c.b16 %v840, %v838
        %v1029 = vpack.c.b16 %v843, %v841
        %v1030 = vpack.c.b16 %v844, %v842
        %v1031 = vpack.c.b16 %v847, %v845
        %v1032 = vpack.c.b16 %v848, %v846
        %v1033 = vpack.c.b16 %v851, %v849
        %v1034 = vpack.c.b16 %v852, %v850
        %v1035 = vpack.c.b16 %v855, %v853
        %v1036 = vpack.c.b16 %v856, %v854
        %v1037 = vpack.c.b16 %v859, %v857
        %v1038 = vpack.c.b16 %v860, %v858
        %v1039 = vpack.c.b16 %v863, %v861
        %v1040 = vpack.c.b16 %v864, %v862
        %v1041 = vpack.c.b16 %v867, %v865
        %v1042 = vpack.c.b16 %v868, %v866
        %v1043 = vpack.c.b16 %v871, %v869
        %v1044 = vpack.c.b16 %v872, %v870
        %v1045 = vpack.c.b16 %v875, %v873
        %v1046 = vpack.c.b16 %v876, %v874
        %v1047 = vpack.c.b16 %v879, %v877
        %v1048 = vpack.c.b16 %v880, %v878
        %v1049 = vpack.c.b16 %v883, %v881
        %v1050 = vpack.c.b16 %v884, %v882
        %v1051 = vpack.c.b16 %v887, %v885
        %v1052 = vpack.c.b16 %v888, %v886
        %v1053 = vpack.c.b16 %v891, %v889
        %v1054 = vpack.c.b16 %v892, %v890
        %v1055 = vpack.c.b16 %v895, %v893
        %v1056 = vpack.c.b16 %v896, %v894
        %v1057 = vpack.c.b16 %v899, %v897
        %v1058 = vpack.c.b16 %v900, %v898
        %v1059 = vpack.c.b16 %v903, %v901
        %v1060 = vpack.c.b16 %v904, %v902
        %v1061 = vpack.c.b16 %v907, %v905
        %v1062 = vpack.c.b16 %v908, %v906
        %v1063 = vpack.c.b16 %v911, %v909
        %v1064 = vpack.c.b16 %v912, %v910
        %v1065 = vpack.c.b16 %v915, %v913
        %v1066 = vpack.c.b16 %v916, %v914
        %v1067 = vpack.c.b16 %v919, %v917
        %v1068 = vpack.c.b16 %v920, %v918
        %v1069 = vpack.c.b16 %v923, %v921
        %v1070 = vpack.c.b16 %v924, %v922
        %v1071 = vpack.c.b16 %v927, %v925
        %v1072 = vpack.c.b16 %v928, %v926
        %v1073 = vpack.c.b16 %v931, %v929
        %v1074 = vpack.c.b16 %v932, %v930
        %v1075 = vpack.c.b16 %v935, %v933
        %v1076 = vpack.c.b16 %v936, %v934
        %v1077 = vpack.c.b16 %v939, %v937
        %v1078 = vpack.c.b16 %v940, %v938
        %v1079 = vpack.c.b16 %v943, %v941
        %v1080 = vpack.c.b16 %v944, %v942
        %v1081 = vpack.c.b16 %v947, %v945
        %v1082 = vpack.c.b16 %v948, %v946
        %v1083 = vpack.c.b16 %v951, %v949
        %v1084 = vpack.c.b16 %v952, %v950
        %v1085 = vpack.c.b16 %v955, %v953
        %v1086 = vpack.c.b16 %v956, %v954
        %v1087 = vpack.c.b16 %v959, %v957
        %v1088 = vpack.c.b16 %v960, %v958
        %1217 = vmatpush.bf16.msra.mxu0 %v975
        %1218 = vmatpush.bf16.msra.mxu0 %v973
        %1219 = vmatpush.bf16.msra.mxu0 %v971
        %1220 = vmatpush.bf16.msra.mxu0 %v969
        %1221 = vmatpush.bf16.msra.mxu0 %v967
        %1222 = vmatpush.bf16.msra.mxu0 %v965
        %1223 = vmatpush.bf16.msra.mxu0 %v963
        %1224 = vmatpush.bf16.msra.mxu0 %v961
        %1225 = vmatmul.bf16.gmra.mxu0 %v561
        %v1226 = vpop.f32.mrf.mxu0
        %v1227 = vadd.f32 %v545, %v1226
        %v1228 = vpop.f32.mrf.mxu0
        %1229 = vdwg.mxu0
        %1230 = vmatpush.bf16.msra.mxu0 %v991
        %1231 = vmatpush.bf16.msra.mxu0 %v989
        %1232 = vmatpush.bf16.msra.mxu0 %v987
        %1233 = vmatpush.bf16.msra.mxu0 %v985
        %1234 = vmatpush.bf16.msra.mxu0 %v983
        %1235 = vmatpush.bf16.msra.mxu0 %v981
        %1236 = vmatpush.bf16.msra.mxu0 %v979
        %1237 = vmatpush.bf16.msra.mxu0 %v977
        %1238 = vmatmul.bf16.gmra.mxu0 %v562
        %v1239 = vpop.f32.mrf.mxu0
        %v1240 = vadd.f32 %v1227, %v1239
        %v1241 = vpop.f32.mrf.mxu0
        %1242 = vdwg.mxu0
        %1243 = vmatpush.bf16.msra.mxu0 %v1007
        %1244 = vmatpush.bf16.msra.mxu0 %v1005
        %1245 = vmatpush.bf16.msra.mxu0 %v1003
        %1246 = vmatpush.bf16.msra.mxu0 %v1001
        %1247 = vmatpush.bf16.msra.mxu0 %v999
        %1248 = vmatpush.bf16.msra.mxu0 %v997
        %1249 = vmatpush.bf16.msra.mxu0 %v995
        %1250 = vmatpush.bf16.msra.mxu0 %v993
        %1251 = vmatmul.bf16.gmra.mxu0 %v563
        %v1252 = vpop.f32.mrf.mxu0
        %v1253 = vadd.f32 %v1240, %v1252
        %v1254 = vpop.f32.mrf.mxu0
        %1255 = vdwg.mxu0
        %1256 = vmatpush.bf16.msra.mxu0 %v1023
        %1257 = vmatpush.bf16.msra.mxu0 %v1021
        %1258 = vmatpush.bf16.msra.mxu0 %v1019
        %1259 = vmatpush.bf16.msra.mxu0 %v1017
        %1260 = vmatpush.bf16.msra.mxu0 %v1015
        %1261 = vmatpush.bf16.msra.mxu0 %v1013
        %1262 = vmatpush.bf16.msra.mxu0 %v1011
        %1263 = vmatpush.bf16.msra.mxu0 %v1009
        %1264 = vmatmul.bf16.gmra.mxu0 %v564
        %v1265 = vpop.f32.mrf.mxu0
        %v1266 = vadd.f32 %v1253, %v1265
        %v1267 = vpop.f32.mrf.mxu0
        %1268 = vdwg.mxu0
        %1269 = vmatpush.bf16.msra.mxu0 %v1039
        %1270 = vmatpush.bf16.msra.mxu0 %v1037
        %1271 = vmatpush.bf16.msra.mxu0 %v1035
        %1272 = vmatpush.bf16.msra.mxu0 %v1033
        %1273 = vmatpush.bf16.msra.mxu0 %v1031
        %1274 = vmatpush.bf16.msra.mxu0 %v1029
        %1275 = vmatpush.bf16.msra.mxu0 %v1027
        %1276 = vmatpush.bf16.msra.mxu0 %v1025
        %1277 = vmatmul.bf16.gmra.mxu0 %v565
        %v1278 = vpop.f32.mrf.mxu0
        %v1279 = vadd.f32 %v1266, %v1278
        %v1280 = vpop.f32.mrf.mxu0
        %1281 = vdwg.mxu0
        %1282 = vmatpush.bf16.msra.mxu0 %v1055
        %1283 = vmatpush.bf16.msra.mxu0 %v1053
        %1284 = vmatpush.bf16.msra.mxu0 %v1051
        %1285 = vmatpush.bf16.msra.mxu0 %v1049
        %1286 = vmatpush.bf16.msra.mxu0 %v1047
        %1287 = vmatpush.bf16.msra.mxu0 %v1045
        %1288 = vmatpush.bf16.msra.mxu0 %v1043
        %1289 = vmatpush.bf16.msra.mxu0 %v1041
        %1290 = vmatmul.bf16.gmra.mxu0 %v566
        %v1291 = vpop.f32.mrf.mxu0
        %v1292 = vadd.f32 %v1279, %v1291
        %v1293 = vpop.f32.mrf.mxu0
        %1294 = vdwg.mxu0
        %1295 = vmatpush.bf16.msra.mxu0 %v1071
        %1296 = vmatpush.bf16.msra.mxu0 %v1069
        %1297 = vmatpush.bf16.msra.mxu0 %v1067
        %1298 = vmatpush.bf16.msra.mxu0 %v1065
        %1299 = vmatpush.bf16.msra.mxu0 %v1063
        %1300 = vmatpush.bf16.msra.mxu0 %v1061
        %1301 = vmatpush.bf16.msra.mxu0 %v1059
        %1302 = vmatpush.bf16.msra.mxu0 %v1057
        %1303 = vmatmul.bf16.gmra.mxu0 %v567
        %v1304 = vpop.f32.mrf.mxu0
        %v1305 = vadd.f32 %v1292, %v1304
        %v1306 = vpop.f32.mrf.mxu0
        %1307 = vdwg.mxu0
        %1308 = vmatpush.bf16.msra.mxu0 %v1087
        %1309 = vmatpush.bf16.msra.mxu0 %v1085
        %1310 = vmatpush.bf16.msra.mxu0 %v1083
        %1311 = vmatpush.bf16.msra.mxu0 %v1081
        %1312 = vmatpush.bf16.msra.mxu0 %v1079
        %1313 = vmatpush.bf16.msra.mxu0 %v1077
        %1314 = vmatpush.bf16.msra.mxu0 %v1075
        %1315 = vmatpush.bf16.msra.mxu0 %v1073
        %1316 = vmatmul.bf16.gmra.mxu0 %v568
        %v1317 = vpop.f32.mrf.mxu0
        %v1318 = vadd.f32 %v1305, %v1317
        %v1319 = vpop.f32.mrf.mxu0
        %1320 = vdwg.mxu0
        %1321 = vmatpush.bf16.msra.mxu0 %v976
        %1322 = vmatpush.bf16.msra.mxu0 %v974
        %1323 = vmatpush.bf16.msra.mxu0 %v972
        %1324 = vmatpush.bf16.msra.mxu0 %v970
        %1325 = vmatpush.bf16.msra.mxu0 %v968
        %1326 = vmatpush.bf16.msra.mxu0 %v966
        %1327 = vmatpush.bf16.msra.mxu0 %v964
        %1328 = vmatpush.bf16.msra.mxu0 %v962
        %1329 = vmatmul.bf16.gmra.mxu0 %v561
        %v1330 = vpop.f32.mrf.mxu0
        %v1331 = vadd.f32 %v546, %v1330
        %v1332 = vpop.f32.mrf.mxu0
        %1333 = vdwg.mxu0
        %1334 = vmatpush.bf16.msra.mxu0 %v992
        %1335 = vmatpush.bf16.msra.mxu0 %v990
        %1336 = vmatpush.bf16.msra.mxu0 %v988
        %1337 = vmatpush.bf16.msra.mxu0 %v986
        %1338 = vmatpush.bf16.msra.mxu0 %v984
        %1339 = vmatpush.bf16.msra.mxu0 %v982
        %1340 = vmatpush.bf16.msra.mxu0 %v980
        %1341 = vmatpush.bf16.msra.mxu0 %v978
        %1342 = vmatmul.bf16.gmra.mxu0 %v562
        %v1343 = vpop.f32.mrf.mxu0
        %v1344 = vadd.f32 %v1331, %v1343
        %v1345 = vpop.f32.mrf.mxu0
        %1346 = vdwg.mxu0
        %1347 = vmatpush.bf16.msra.mxu0 %v1008
        %1348 = vmatpush.bf16.msra.mxu0 %v1006
        %1349 = vmatpush.bf16.msra.mxu0 %v1004
        %1350 = vmatpush.bf16.msra.mxu0 %v1002
        %1351 = vmatpush.bf16.msra.mxu0 %v1000
        %1352 = vmatpush.bf16.msra.mxu0 %v998
        %1353 = vmatpush.bf16.msra.mxu0 %v996
        %1354 = vmatpush.bf16.msra.mxu0 %v994
        %1355 = vmatmul.bf16.gmra.mxu0 %v563
        %v1356 = vpop.f32.mrf.mxu0
        %v1357 = vadd.f32 %v1344, %v1356
        %v1358 = vpop.f32.mrf.mxu0
        %1359 = vdwg.mxu0
        %1360 = vmatpush.bf16.msra.mxu0 %v1024
        %1361 = vmatpush.bf16.msra.mxu0 %v1022
        %1362 = vmatpush.bf16.msra.mxu0 %v1020
        %1363 = vmatpush.bf16.msra.mxu0 %v1018
        %1364 = vmatpush.bf16.msra.mxu0 %v1016
        %1365 = vmatpush.bf16.msra.mxu0 %v1014
        %1366 = vmatpush.bf16.msra.mxu0 %v1012
        %1367 = vmatpush.bf16.msra.mxu0 %v1010
        %1368 = vmatmul.bf16.gmra.mxu0 %v564
        %v1369 = vpop.f32.mrf.mxu0
        %v1370 = vadd.f32 %v1357, %v1369
        %v1371 = vpop.f32.mrf.mxu0
        %1372 = vdwg.mxu0
        %1373 = vmatpush.bf16.msra.mxu0 %v1040
        %1374 = vmatpush.bf16.msra.mxu0 %v1038
        %1375 = vmatpush.bf16.msra.mxu0 %v1036
        %1376 = vmatpush.bf16.msra.mxu0 %v1034
        %1377 = vmatpush.bf16.msra.mxu0 %v1032
        %1378 = vmatpush.bf16.msra.mxu0 %v1030
        %1379 = vmatpush.bf16.msra.mxu0 %v1028
        %1380 = vmatpush.bf16.msra.mxu0 %v1026
        %1381 = vmatmul.bf16.gmra.mxu0 %v565
        %v1382 = vpop.f32.mrf.mxu0
        %v1383 = vadd.f32 %v1370, %v1382
        %v1384 = vpop.f32.mrf.mxu0
        %1385 = vdwg.mxu0
        %1386 = vmatpush.bf16.msra.mxu0 %v1056
        %1387 = vmatpush.bf16.msra.mxu0 %v1054
        %1388 = vmatpush.bf16.msra.mxu0 %v1052
        %1389 = vmatpush.bf16.msra.mxu0 %v1050
        %1390 = vmatpush.bf16.msra.mxu0 %v1048
        %1391 = vmatpush.bf16.msra.mxu0 %v1046
        %1392 = vmatpush.bf16.msra.mxu0 %v1044
        %1393 = vmatpush.bf16.msra.mxu0 %v1042
        %1394 = vmatmul.bf16.gmra.mxu0 %v566
        %v1395 = vpop.f32.mrf.mxu0
        %v1396 = vadd.f32 %v1383, %v1395
        %v1397 = vpop.f32.mrf.mxu0
        %1398 = vdwg.mxu0
        %1399 = vmatpush.bf16.msra.mxu0 %v1072
        %1400 = vmatpush.bf16.msra.mxu0 %v1070
        %1401 = vmatpush.bf16.msra.mxu0 %v1068
        %1402 = vmatpush.bf16.msra.mxu0 %v1066
        %1403 = vmatpush.bf16.msra.mxu0 %v1064
        %1404 = vmatpush.bf16.msra.mxu0 %v1062
        %1405 = vmatpush.bf16.msra.mxu0 %v1060
        %1406 = vmatpush.bf16.msra.mxu0 %v1058
        %1407 = vmatmul.bf16.gmra.mxu0 %v567
        %v1408 = vpop.f32.mrf.mxu0
        %v1409 = vadd.f32 %v1396, %v1408
        %v1410 = vpop.f32.mrf.mxu0
        %1411 = vdwg.mxu0
        %1412 = vmatpush.bf16.msra.mxu0 %v1088
        %1413 = vmatpush.bf16.msra.mxu0 %v1086
        %1414 = vmatpush.bf16.msra.mxu0 %v1084
        %1415 = vmatpush.bf16.msra.mxu0 %v1082
        %1416 = vmatpush.bf16.msra.mxu0 %v1080
        %1417 = vmatpush.bf16.msra.mxu0 %v1078
        %1418 = vmatpush.bf16.msra.mxu0 %v1076
        %1419 = vmatpush.bf16.msra.mxu0 %v1074
        %1420 = vmatmul.bf16.gmra.mxu0 %v568
        %v1421 = vpop.f32.mrf.mxu0
        %v1422 = vadd.f32 %v1409, %v1421
        %v1423 = vpop.f32.mrf.mxu0
        %1424 = vdwg.mxu0
        %v1425 = vmax.f32 %v1318, 0.0
        %v1426 = vmax.f32 %v1422, 0.0
        %v1427 = vpack.c.bf16 %v1425, %v1425
        %v1428 = vpack.c.bf16 %v1426, %v1426
        %v1429 = vld [vmem:[%s3] sm:$0xf]
        %v1430 = vld [vmem:[%s3 + $0x4] sm:$0xf]
        %v1431 = vld [vmem:[%s3 + $0x8] sm:$0xf]
        %v1432 = vld [vmem:[%s3 + $0xc] sm:$0xf]
        %v1433 = vld [vmem:[%s3 + $0x10] sm:$0xf]
        %v1434 = vld [vmem:[%s3 + $0x14] sm:$0xf]
        %v1435 = vld [vmem:[%s3 + $0x18] sm:$0xf]
        %v1436 = vld [vmem:[%s3 + $0x1c] sm:$0xf]
        %v1437 = vld [vmem:[%s3 + $0x20] sm:$0xf]
        %v1438 = vld [vmem:[%s3 + $0x24] sm:$0xf]
        %v1439 = vld [vmem:[%s3 + $0x28] sm:$0xf]
        %v1440 = vld [vmem:[%s3 + $0x2c] sm:$0xf]
        %v1441 = vld [vmem:[%s3 + $0x30] sm:$0xf]
        %v1442 = vld [vmem:[%s3 + $0x34] sm:$0xf]
        %v1443 = vld [vmem:[%s3 + $0x38] sm:$0xf]
        %v1444 = vld [vmem:[%s3 + $0x3c] sm:$0xf]
        %v1445 = vld [vmem:[%s3 + $0x40] sm:$0xf]
        %v1446 = vld [vmem:[%s3 + $0x44] sm:$0xf]
        %v1447 = vld [vmem:[%s3 + $0x48] sm:$0xf]
        %v1448 = vld [vmem:[%s3 + $0x4c] sm:$0xf]
        %v1449 = vld [vmem:[%s3 + $0x50] sm:$0xf]
        %v1450 = vld [vmem:[%s3 + $0x54] sm:$0xf]
        %v1451 = vld [vmem:[%s3 + $0x58] sm:$0xf]
        %v1452 = vld [vmem:[%s3 + $0x5c] sm:$0xf]
        %v1453 = vld [vmem:[%s3 + $0x60] sm:$0xf]
        %v1454 = vld [vmem:[%s3 + $0x64] sm:$0xf]
        %v1455 = vld [vmem:[%s3 + $0x68] sm:$0xf]
        %v1456 = vld [vmem:[%s3 + $0x6c] sm:$0xf]
        %v1457 = vld [vmem:[%s3 + $0x70] sm:$0xf]
        %v1458 = vld [vmem:[%s3 + $0x74] sm:$0xf]
        %v1459 = vld [vmem:[%s3 + $0x78] sm:$0xf]
        %v1460 = vld [vmem:[%s3 + $0x7c] sm:$0xf]
        %v1461 = vld [vmem:[%s4] sm:$0x1]
        %v1463 = vperm.slane %v1461, 0
        %v1497 = vunpack.c.l.b16 %v1429
        %v1498 = vunpack.c.l.b16 %v1430
        %v1499 = vunpack.c.l.b16 %v1431
        %v1500 = vunpack.c.l.b16 %v1432
        %v1501 = vunpack.c.l.b16 %v1433
        %v1502 = vunpack.c.l.b16 %v1434
        %v1503 = vunpack.c.l.b16 %v1435
        %v1504 = vunpack.c.l.b16 %v1436
        %v1505 = vunpack.c.l.b16 %v1437
        %v1506 = vunpack.c.l.b16 %v1438
        %v1507 = vunpack.c.l.b16 %v1439
        %v1508 = vunpack.c.l.b16 %v1440
        %v1509 = vunpack.c.l.b16 %v1441
        %v1510 = vunpack.c.l.b16 %v1442
        %v1511 = vunpack.c.l.b16 %v1443
        %v1512 = vunpack.c.l.b16 %v1444
        %v1513 = vunpack.c.l.b16 %v1445
        %v1514 = vunpack.c.l.b16 %v1446
        %v1515 = vunpack.c.l.b16 %v1447
        %v1516 = vunpack.c.l.b16 %v1448
        %v1517 = vunpack.c.l.b16 %v1449
        %v1518 = vunpack.c.l.b16 %v1450
        %v1519 = vunpack.c.l.b16 %v1451
        %v1520 = vunpack.c.l.b16 %v1452
        %v1521 = vunpack.c.l.b16 %v1453
        %v1522 = vunpack.c.l.b16 %v1454
        %v1523 = vunpack.c.l.b16 %v1455
        %v1524 = vunpack.c.l.b16 %v1456
        %v1525 = vunpack.c.l.b16 %v1457
        %v1526 = vunpack.c.l.b16 %v1458
        %v1527 = vunpack.c.l.b16 %v1459
        %v1528 = vunpack.c.l.b16 %v1460
        %v1529 = vpack.c.b16 %v1498, %v1497
        %v1530 = vpack.c.b16 %v1500, %v1499
        %v1531 = vpack.c.b16 %v1502, %v1501
        %v1532 = vpack.c.b16 %v1504, %v1503
        %v1533 = vpack.c.b16 %v1506, %v1505
        %v1534 = vpack.c.b16 %v1508, %v1507
        %v1535 = vpack.c.b16 %v1510, %v1509
        %v1536 = vpack.c.b16 %v1512, %v1511
        %v1537 = vpack.c.b16 %v1514, %v1513
        %v1538 = vpack.c.b16 %v1516, %v1515
        %v1539 = vpack.c.b16 %v1518, %v1517
        %v1540 = vpack.c.b16 %v1520, %v1519
        %v1541 = vpack.c.b16 %v1522, %v1521
        %v1542 = vpack.c.b16 %v1524, %v1523
        %v1543 = vpack.c.b16 %v1526, %v1525
        %v1544 = vpack.c.b16 %v1528, %v1527
        %1561 = vmatpush.bf16.msra.mxu0 %v1536
        %1562 = vmatpush.bf16.msra.mxu0 %v1535
        %1563 = vmatpush.bf16.msra.mxu0 %v1534
        %1564 = vmatpush.bf16.msra.mxu0 %v1533
        %1565 = vmatpush.bf16.msra.mxu0 %v1532
        %1566 = vmatpush.bf16.msra.mxu0 %v1531
        %1567 = vmatpush.bf16.msra.mxu0 %v1530
        %1568 = vmatpush.bf16.msra.mxu0 %v1529
        %1569 = vmatmul.bf16.gmra.mxu0 %v1427
        %v1570 = vpop.f32.mrf.mxu0
        %v1571 = vadd.f32 %v1463, %v1570
        %v1572 = vpop.f32.mrf.mxu0
        %1573 = vdwg.mxu0
        %1574 = vmatpush.bf16.msra.mxu0 %v1544
        %1575 = vmatpush.bf16.msra.mxu0 %v1543
        %1576 = vmatpush.bf16.msra.mxu0 %v1542
        %1577 = vmatpush.bf16.msra.mxu0 %v1541
        %1578 = vmatpush.bf16.msra.mxu0 %v1540
        %1579 = vmatpush.bf16.msra.mxu0 %v1539
        %1580 = vmatpush.bf16.msra.mxu0 %v1538
        %1581 = vmatpush.bf16.msra.mxu0 %v1537
        %1582 = vmatmul.bf16.gmra.mxu0 %v1428
        %v1583 = vpop.f32.mrf.mxu0
        %v1584 = vadd.f32 %v1571, %v1583
        %v1585 = vpop.f32.mrf.mxu0
        %1586 = vdwg.mxu0
        %v1587 = vmul.f32 %v1584, 1.442695
        %v1588 = vpow.pop %v1587
        %v1589 = vld [vmem:[%s359] sm:$0xff]
        %1591 = vrot.lane.b32.xlu0 %v1589, 32
        %v1592 = vpop.permute.xlu0 %1591
        %v1594 = vmul.f32 %v1588, %v1592
        %1596 = vrot.lane.b32.xlu0 %v1594, 96
        %v1597 = vpop.permute.xlu0 %1596
        %v1599 = vadd.f32 %v1584, %v1597
        %v1600 = vpack.c.bf16 %v1599, %v1599
        %v1601 = vld [vmem:[%s5] sm:$0xff]
        %v1602 = vld [vmem:[%s5 + $0x8] sm:$0xff]
        %v1603 = vld [vmem:[%s5 + $0x10] sm:$0xff]
        %v1604 = vld [vmem:[%s5 + $0x18] sm:$0xff]
        %v1605 = vld [vmem:[%s5 + $0x20] sm:$0xff]
        %v1606 = vld [vmem:[%s5 + $0x28] sm:$0xff]
        %v1607 = vld [vmem:[%s5 + $0x30] sm:$0xff]
        %v1608 = vld [vmem:[%s5 + $0x38] sm:$0xff]
        %v1609 = vld [vmem:[%s5 + $0x40] sm:$0xff]
        %v1610 = vld [vmem:[%s5 + $0x48] sm:$0xff]
        %v1611 = vld [vmem:[%s5 + $0x50] sm:$0xff]
        %v1612 = vld [vmem:[%s5 + $0x58] sm:$0xff]
        %v1613 = vld [vmem:[%s5 + $0x60] sm:$0xff]
        %v1614 = vld [vmem:[%s5 + $0x68] sm:$0xff]
        %v1615 = vld [vmem:[%s5 + $0x70] sm:$0xff]
        %v1616 = vld [vmem:[%s5 + $0x78] sm:$0xff]
        %v1617 = vld [vmem:[#allocation5] sm:$0xff]
        %v1619 = vperm.slane %v1617, 0
        %v1620 = vperm.slane %v1617, 1
        %v1621 = vperm.slane %v1617, 2
        %v1622 = vperm.slane %v1617, 3
        %v1623 = vperm.slane %v1617, 4
        %v1624 = vperm.slane %v1617, 5
        %v1625 = vperm.slane %v1617, 6
        %v1626 = vperm.slane %v1617, 7
        %v1651 = vunpack.c.l.b16 %v1601
        %v1652 = vunpack.c.h.b16 %v1601
        %v1653 = vunpack.c.l.b16 %v1602
        %v1654 = vunpack.c.h.b16 %v1602
        %v1655 = vunpack.c.l.b16 %v1603
        %v1656 = vunpack.c.h.b16 %v1603
        %v1657 = vunpack.c.l.b16 %v1604
        %v1658 = vunpack.c.h.b16 %v1604
        %v1659 = vunpack.c.l.b16 %v1605
        %v1660 = vunpack.c.h.b16 %v1605
        %v1661 = vunpack.c.l.b16 %v1606
        %v1662 = vunpack.c.h.b16 %v1606
        %v1663 = vunpack.c.l.b16 %v1607
        %v1664 = vunpack.c.h.b16 %v1607
        %v1665 = vunpack.c.l.b16 %v1608
        %v1666 = vunpack.c.h.b16 %v1608
        %v1667 = vunpack.c.l.b16 %v1609
        %v1668 = vunpack.c.h.b16 %v1609
        %v1669 = vunpack.c.l.b16 %v1610
        %v1670 = vunpack.c.h.b16 %v1610
        %v1671 = vunpack.c.l.b16 %v1611
        %v1672 = vunpack.c.h.b16 %v1611
        %v1673 = vunpack.c.l.b16 %v1612
        %v1674 = vunpack.c.h.b16 %v1612
        %v1675 = vunpack.c.l.b16 %v1613
        %v1676 = vunpack.c.h.b16 %v1613
        %v1677 = vunpack.c.l.b16 %v1614
        %v1678 = vunpack.c.h.b16 %v1614
        %v1679 = vunpack.c.l.b16 %v1615
        %v1680 = vunpack.c.h.b16 %v1615
        %v1681 = vunpack.c.l.b16 %v1616
        %v1682 = vunpack.c.h.b16 %v1616
        %v1683 = vpack.c.b16 %v1659, %v1651
        %v1684 = vpack.c.b16 %v1660, %v1652
        %v1685 = vpack.c.b16 %v1661, %v1653
        %v1686 = vpack.c.b16 %v1662, %v1654
        %v1687 = vpack.c.b16 %v1663, %v1655
        %v1688 = vpack.c.b16 %v1664, %v1656
        %v1689 = vpack.c.b16 %v1665, %v1657
        %v1690 = vpack.c.b16 %v1666, %v1658
        %v1691 = vpack.c.b16 %v1675, %v1667
        %v1692 = vpack.c.b16 %v1676, %v1668
        %v1693 = vpack.c.b16 %v1677, %v1669
        %v1694 = vpack.c.b16 %v1678, %v1670
        %v1695 = vpack.c.b16 %v1679, %v1671
        %v1696 = vpack.c.b16 %v1680, %v1672
        %v1697 = vpack.c.b16 %v1681, %v1673
        %v1698 = vpack.c.b16 %v1682, %v1674
        %vm1715 = vcmask 261120
        %v1717 = vsel %vm1715, %v1600, 0
        %1719 = vmatpush.bf16.msra.mxu0 0
        %1720 = vmatpush.bf16.msra.mxu0 0
        %1721 = vmatpush.bf16.msra.mxu0 0
        %1722 = vmatpush.bf16.msra.mxu0 0
        %1723 = vmatpush.bf16.msra.mxu0 0
        %1724 = vmatpush.bf16.msra.mxu0 0
        %1725 = vmatpush.bf16.msra.mxu0 %v1691
        %1726 = vmatpush.bf16.msra.mxu0 %v1683
        %1727 = vmatmul.bf16.gmra.mxu0 %v1717
        %v1728 = vpop.f32.mrf.mxu0
        %v1729 = vadd.f32 %v1619, %v1728
        %v1730 = vpop.f32.mrf.mxu0
        %1731 = vdwg.mxu0
        %1732 = vmatpush.bf16.msra.mxu0 0
        %1733 = vmatpush.bf16.msra.mxu0 0
        %1734 = vmatpush.bf16.msra.mxu0 0
        %1735 = vmatpush.bf16.msra.mxu0 0
        %1736 = vmatpush.bf16.msra.mxu0 0
        %1737 = vmatpush.bf16.msra.mxu0 0
        %1738 = vmatpush.bf16.msra.mxu0 %v1692
        %1739 = vmatpush.bf16.msra.mxu0 %v1684
        %1740 = vmatmul.bf16.gmra.mxu0 %v1717
        %v1741 = vpop.f32.mrf.mxu0
        %v1742 = vadd.f32 %v1620, %v1741
        %v1743 = vpop.f32.mrf.mxu0
        %1744 = vdwg.mxu0
        %1745 = vmatpush.bf16.msra.mxu0 0
        %1746 = vmatpush.bf16.msra.mxu0 0
        %1747 = vmatpush.bf16.msra.mxu0 0
        %1748 = vmatpush.bf16.msra.mxu0 0
        %1749 = vmatpush.bf16.msra.mxu0 0
        %1750 = vmatpush.bf16.msra.mxu0 0
        %1751 = vmatpush.bf16.msra.mxu0 %v1693
        %1752 = vmatpush.bf16.msra.mxu0 %v1685
        %1753 = vmatmul.bf16.gmra.mxu0 %v1717
        %v1754 = vpop.f32.mrf.mxu0
        %v1755 = vadd.f32 %v1621, %v1754
        %v1756 = vpop.f32.mrf.mxu0
        %1757 = vdwg.mxu0
        %1758 = vmatpush.bf16.msra.mxu0 0
        %1759 = vmatpush.bf16.msra.mxu0 0
        %1760 = vmatpush.bf16.msra.mxu0 0
        %1761 = vmatpush.bf16.msra.mxu0 0
        %1762 = vmatpush.bf16.msra.mxu0 0
        %1763 = vmatpush.bf16.msra.mxu0 0
        %1764 = vmatpush.bf16.msra.mxu0 %v1694
        %1765 = vmatpush.bf16.msra.mxu0 %v1686
        %1766 = vmatmul.bf16.gmra.mxu0 %v1717
        %v1767 = vpop.f32.mrf.mxu0
        %v1768 = vadd.f32 %v1622, %v1767
        %v1769 = vpop.f32.mrf.mxu0
        %1770 = vdwg.mxu0
        %1771 = vmatpush.bf16.msra.mxu0 0
        %1772 = vmatpush.bf16.msra.mxu0 0
        %1773 = vmatpush.bf16.msra.mxu0 0
        %1774 = vmatpush.bf16.msra.mxu0 0
        %1775 = vmatpush.bf16.msra.mxu0 0
        %1776 = vmatpush.bf16.msra.mxu0 0
        %1777 = vmatpush.bf16.msra.mxu0 %v1695
        %1778 = vmatpush.bf16.msra.mxu0 %v1687
        %1779 = vmatmul.bf16.gmra.mxu0 %v1717
        %v1780 = vpop.f32.mrf.mxu0
        %v1781 = vadd.f32 %v1623, %v1780
        %v1782 = vpop.f32.mrf.mxu0
        %1783 = vdwg.mxu0
        %1784 = vmatpush.bf16.msra.mxu0 0
        %1785 = vmatpush.bf16.msra.mxu0 0
        %1786 = vmatpush.bf16.msra.mxu0 0
        %1787 = vmatpush.bf16.msra.mxu0 0
        %1788 = vmatpush.bf16.msra.mxu0 0
        %1789 = vmatpush.bf16.msra.mxu0 0
        %1790 = vmatpush.bf16.msra.mxu0 %v1696
        %1791 = vmatpush.bf16.msra.mxu0 %v1688
        %1792 = vmatmul.bf16.gmra.mxu0 %v1717
        %v1793 = vpop.f32.mrf.mxu0
        %v1794 = vadd.f32 %v1624, %v1793
        %v1795 = vpop.f32.mrf.mxu0
        %1796 = vdwg.mxu0
        %1797 = vmatpush.bf16.msra.mxu0 0
        %1798 = vmatpush.bf16.msra.mxu0 0
        %1799 = vmatpush.bf16.msra.mxu0 0
        %1800 = vmatpush.bf16.msra.mxu0 0
        %1801 = vmatpush.bf16.msra.mxu0 0
        %1802 = vmatpush.bf16.msra.mxu0 0
        %1803 = vmatpush.bf16.msra.mxu0 %v1697
        %1804 = vmatpush.bf16.msra.mxu0 %v1689
        %1805 = vmatmul.bf16.gmra.mxu0 %v1717
        %v1806 = vpop.f32.mrf.mxu0
        %v1807 = vadd.f32 %v1625, %v1806
        %v1808 = vpop.f32.mrf.mxu0
        %1809 = vdwg.mxu0
        %1810 = vmatpush.bf16.msra.mxu0 0
        %1811 = vmatpush.bf16.msra.mxu0 0
        %1812 = vmatpush.bf16.msra.mxu0 0
        %1813 = vmatpush.bf16.msra.mxu0 0
        %1814 = vmatpush.bf16.msra.mxu0 0
        %1815 = vmatpush.bf16.msra.mxu0 0
        %1816 = vmatpush.bf16.msra.mxu0 %v1698
        %1817 = vmatpush.bf16.msra.mxu0 %v1690
        %1818 = vmatmul.bf16.gmra.mxu0 %v1717
        %v1819 = vpop.f32.mrf.mxu0
        %v1820 = vadd.f32 %v1626, %v1819
        %v1821 = vpop.f32.mrf.mxu0
        %1822 = vdwg.mxu0
        %v1823 = vxor.u32 %v1729, 2147483648
        %v1824 = vxor.u32 %v1742, 2147483648
        %v1825 = vxor.u32 %v1755, 2147483648
        %v1826 = vxor.u32 %v1768, 2147483648
        %v1827 = vxor.u32 %v1781, 2147483648
        %v1828 = vxor.u32 %v1794, 2147483648
        %v1829 = vxor.u32 %v1807, 2147483648
        %v1830 = vxor.u32 %v1820, 2147483648
        %v1831 = vmul.f32 %v1823, 1.442695
        %v1832 = vpow.pop %v1831
        %v1833 = vmul.f32 %v1824, 1.442695
        %v1834 = vpow.pop %v1833
        %v1835 = vmul.f32 %v1825, 1.442695
        %v1836 = vpow.pop %v1835
        %v1837 = vmul.f32 %v1826, 1.442695
        %v1838 = vpow.pop %v1837
        %v1839 = vmul.f32 %v1827, 1.442695
        %v1840 = vpow.pop %v1839
        %v1841 = vmul.f32 %v1828, 1.442695
        %v1842 = vpow.pop %v1841
        %v1843 = vmul.f32 %v1829, 1.442695
        %v1844 = vpow.pop %v1843
        %v1845 = vmul.f32 %v1830, 1.442695
        %v1846 = vpow.pop %v1845
        %v1847 = vadd.f32 %v1832, 1.0
        %v1848 = vadd.f32 %v1834, 1.0
        %v1849 = vadd.f32 %v1836, 1.0
        %v1850 = vadd.f32 %v1838, 1.0
        %v1851 = vadd.f32 %v1840, 1.0
        %v1852 = vadd.f32 %v1842, 1.0
        %v1853 = vadd.f32 %v1844, 1.0
        %v1854 = vadd.f32 %v1846, 1.0
        %v1855 = vrcp.pop %v1847
        %v1856 = vmul.f32 %v1847, %v1855
        %v1857 = vsub.f32 1.0, %v1856
        %v1858 = vmul.f32 %v1855, %v1857
        %v1859 = vadd.f32 %v1855, %v1858
        %vm1860 = vweird.f32 %v1847
        %vm1861 = vweird.f32 %v1855
        %vm1862 = vmor %vm1860, %vm1861
        %v1863 = vsel %vm1862, %v1855, %v1859
        %v1864 = vand.u32 2147483647, %v1847
        %vm1865 = vcmp.eq.f32.partialorder %v1864, 8.507059e+37
        %v1866 = vand.u32 %v1847, 2147483648
        %v1867 = vor.u32 1.1754944e-38, %v1866
        %v1868 = vsel %vm1865, %v1867, %v1863
        %v1869 = vmul.f32 1.0, %v1868
        %v1870 = vrcp.pop %v1848
        %v1871 = vmul.f32 %v1848, %v1870
        %v1872 = vsub.f32 1.0, %v1871
        %v1873 = vmul.f32 %v1870, %v1872
        %v1874 = vadd.f32 %v1870, %v1873
        %vm1875 = vweird.f32 %v1848
        %vm1876 = vweird.f32 %v1870
        %vm1877 = vmor %vm1875, %vm1876
        %v1878 = vsel %vm1877, %v1870, %v1874
        %v1879 = vand.u32 2147483647, %v1848
        %vm1880 = vcmp.eq.f32.partialorder %v1879, 8.507059e+37
        %v1881 = vand.u32 %v1848, 2147483648
        %v1882 = vor.u32 1.1754944e-38, %v1881
        %v1883 = vsel %vm1880, %v1882, %v1878
        %v1884 = vmul.f32 1.0, %v1883
        %v1885 = vrcp.pop %v1849
        %v1886 = vmul.f32 %v1849, %v1885
        %v1887 = vsub.f32 1.0, %v1886
        %v1888 = vmul.f32 %v1885, %v1887
        %v1889 = vadd.f32 %v1885, %v1888
        %vm1890 = vweird.f32 %v1849
        %vm1891 = vweird.f32 %v1885
        %vm1892 = vmor %vm1890, %vm1891
        %v1893 = vsel %vm1892, %v1885, %v1889
        %v1894 = vand.u32 2147483647, %v1849
        %vm1895 = vcmp.eq.f32.partialorder %v1894, 8.507059e+37
        %v1896 = vand.u32 %v1849, 2147483648
        %v1897 = vor.u32 1.1754944e-38, %v1896
        %v1898 = vsel %vm1895, %v1897, %v1893
        %v1899 = vmul.f32 1.0, %v1898
        %v1900 = vrcp.pop %v1850
        %v1901 = vmul.f32 %v1850, %v1900
        %v1902 = vsub.f32 1.0, %v1901
        %v1903 = vmul.f32 %v1900, %v1902
        %v1904 = vadd.f32 %v1900, %v1903
        %vm1905 = vweird.f32 %v1850
        %vm1906 = vweird.f32 %v1900
        %vm1907 = vmor %vm1905, %vm1906
        %v1908 = vsel %vm1907, %v1900, %v1904
        %v1909 = vand.u32 2147483647, %v1850
        %vm1910 = vcmp.eq.f32.partialorder %v1909, 8.507059e+37
        %v1911 = vand.u32 %v1850, 2147483648
        %v1912 = vor.u32 1.1754944e-38, %v1911
        %v1913 = vsel %vm1910, %v1912, %v1908
        %v1914 = vmul.f32 1.0, %v1913
        %v1915 = vrcp.pop %v1851
        %v1916 = vmul.f32 %v1851, %v1915
        %v1917 = vsub.f32 1.0, %v1916
        %v1918 = vmul.f32 %v1915, %v1917
        %v1919 = vadd.f32 %v1915, %v1918
        %vm1920 = vweird.f32 %v1851
        %vm1921 = vweird.f32 %v1915
        %vm1922 = vmor %vm1920, %vm1921
        %v1923 = vsel %vm1922, %v1915, %v1919
        %v1924 = vand.u32 2147483647, %v1851
        %vm1925 = vcmp.eq.f32.partialorder %v1924, 8.507059e+37
        %v1926 = vand.u32 %v1851, 2147483648
        %v1927 = vor.u32 1.1754944e-38, %v1926
        %v1928 = vsel %vm1925, %v1927, %v1923
        %v1929 = vmul.f32 1.0, %v1928
        %v1930 = vrcp.pop %v1852
        %v1931 = vmul.f32 %v1852, %v1930
        %v1932 = vsub.f32 1.0, %v1931
        %v1933 = vmul.f32 %v1930, %v1932
        %v1934 = vadd.f32 %v1930, %v1933
        %vm1935 = vweird.f32 %v1852
        %vm1936 = vweird.f32 %v1930
        %vm1937 = vmor %vm1935, %vm1936
        %v1938 = vsel %vm1937, %v1930, %v1934
        %v1939 = vand.u32 2147483647, %v1852
        %vm1940 = vcmp.eq.f32.partialorder %v1939, 8.507059e+37
        %v1941 = vand.u32 %v1852, 2147483648
        %v1942 = vor.u32 1.1754944e-38, %v1941
        %v1943 = vsel %vm1940, %v1942, %v1938
        %v1944 = vmul.f32 1.0, %v1943
        %v1945 = vrcp.pop %v1853
        %v1946 = vmul.f32 %v1853, %v1945
        %v1947 = vsub.f32 1.0, %v1946
        %v1948 = vmul.f32 %v1945, %v1947
        %v1949 = vadd.f32 %v1945, %v1948
        %vm1950 = vweird.f32 %v1853
        %vm1951 = vweird.f32 %v1945
        %vm1952 = vmor %vm1950, %vm1951
        %v1953 = vsel %vm1952, %v1945, %v1949
        %v1954 = vand.u32 2147483647, %v1853
        %vm1955 = vcmp.eq.f32.partialorder %v1954, 8.507059e+37
        %v1956 = vand.u32 %v1853, 2147483648
        %v1957 = vor.u32 1.1754944e-38, %v1956
        %v1958 = vsel %vm1955, %v1957, %v1953
        %v1959 = vmul.f32 1.0, %v1958
        %v1960 = vrcp.pop %v1854
        %v1961 = vmul.f32 %v1854, %v1960
        %v1962 = vsub.f32 1.0, %v1961
        %v1963 = vmul.f32 %v1960, %v1962
        %v1964 = vadd.f32 %v1960, %v1963
        %vm1965 = vweird.f32 %v1854
        %vm1966 = vweird.f32 %v1960
        %vm1967 = vmor %vm1965, %vm1966
        %v1968 = vsel %vm1967, %v1960, %v1964
        %v1969 = vand.u32 2147483647, %v1854
        %vm1970 = vcmp.eq.f32.partialorder %v1969, 8.507059e+37
        %v1971 = vand.u32 %v1854, 2147483648
        %v1972 = vor.u32 1.1754944e-38, %v1971
        %v1973 = vsel %vm1970, %v1972, %v1968
        %v1974 = vmul.f32 1.0, %v1973
        %1975 = vst [vmem:[%s397] sm:$0xff] %v1869
        %1976 = vst [vmem:[%s397 + $0x8] sm:$0xff] %v1884
        %1977 = vst [vmem:[%s397 + $0x10] sm:$0xff] %v1899
        %1978 = vst [vmem:[%s397 + $0x18] sm:$0xff] %v1914
        %1979 = vst [vmem:[%s397 + $0x20] sm:$0xff] %v1929
        %1980 = vst [vmem:[%s397 + $0x28] sm:$0xff] %v1944
        %1981 = vst [vmem:[%s397 + $0x30] sm:$0xff] %v1959
        %1982 = vst [vmem:[%s397 + $0x38] sm:$0xff] %v1974
        %v1983 = vsel %vm1715, %v1584, %v1588
        %vm1984 = vcmask 523264
        %1985 = vst.msk [vmem:[%s404] sm:$0xff] %vm1984, %v1983
        %s1986 = sand.u32 %s215, 1
        %s1987 = scalar_lea.sflag [#allocation4], %s1986
        %s1988 = sand.u32 %s215, 1
        %s1989 = smul.addr %s1988, 64
        %s1990 = scalar_lea.vmem [#allocation8], %s1989
        %s1991 = sand.u32 %s241, 1
        %s1992 = scalar_lea.sflag [#allocation10], %s1991
        %s1993 = sand.u32 %s241, 1
        %s1994 = smul.addr %s1993, 8
        %s1995 = scalar_lea.vmem [#allocation9], %s1994
        // Predicated region
        $region65: #{tpu_custom_call.1} parent=51 // pred_check
          %p1996 = pneg %p225
        $region66: #{tpu_custom_call.1} parent=51 // pred_check_branch
          %1998 = sbr.rel (%p1996) target = $region68
        $region67: #{tpu_custom_call.1} parent=51 // pred_region
          %2000 = vsyncadd %s1987, 0
          %s2001 = smul.addr %s29, 8
          %s2002 = smul.addr %s2001, 8
          %s2003 = scalar_lea.hbm %s8, %s2002
          %s2005 = sshll.u32 %s1990, 4
          %s2006 = int_to_ptr.vmem [resolvable:$true] %s2005
          %s2007 = sshll.u32 %s2003, 4
          %s2008 = int_to_ptr.hbm [resolvable:$true] %s2007
          %2010 = dma.vmem_to_hbm [thread:$0]  %s2006, 1024, %s2008, %s1987
        $region68: #{tpu_custom_call.1} parent=51 // pred_fallthru
          _
        // Predicated region
        $region69: #{tpu_custom_call.1} parent=51 // pred_check
          %p2011 = pneg %p251
        $region70: #{tpu_custom_call.1} parent=51 // pred_check_branch
          %2013 = sbr.rel (%p2011) target = $region72
        $region71: #{tpu_custom_call.1} parent=51 // pred_region
          %2015 = vsyncadd %s1992, 0
          %s2016 = smul.addr %s29, 8
          %s2017 = scalar_lea.hbm %s9, %s2016
          %s2019 = sshll.u32 %s1995, 4
          %s2020 = int_to_ptr.vmem [resolvable:$true] %s2019
          %s2021 = sshll.u32 %s2017, 4
          %s2022 = int_to_ptr.hbm [resolvable:$true] %s2021
          %2024 = dma.vmem_to_hbm [thread:$0]  %s2020, 128, %s2022, %s1992
        $region72: #{tpu_custom_call.1} parent=51 // pred_fallthru
          _
      $region52: #{tpu_custom_call.1} parent=5 // pred_fallthru
        _
      %p2025 = scmp.le.s32.totalorder 2, %s24
      // Predicated region
      $region73: #{tpu_custom_call.1} parent=5 // pred_check
        %p2026 = pneg %p2025
      $region74: #{tpu_custom_call.1} parent=5 // pred_check_branch
        %2028 = sbr.rel (%p2026) target = $region76
      $region75: #{tpu_custom_call.1} parent=5 // pred_region
        %s2029 = ssub.s32 %s24, 2
        // Predicated region
        $region77: #{tpu_custom_call.1} parent=75 // pred_check
          %p2030 = pneg %p231
        $region78: #{tpu_custom_call.1} parent=75 // pred_check_branch
          %2032 = sbr.rel (%p2030) target = $region80
        $region79: #{tpu_custom_call.1} parent=75 // pred_region
          %s2033 = sand.u32 %s216, 1
          %s2034 = scalar_lea.sflag [#allocation4], %s2033
          %s2035 = sand.u32 %s216, 1
          %s2036 = smul.addr %s2035, 64
          %s2037 = scalar_lea.vmem [#allocation8], %s2036
          %2039 = dma.done %s2034, 1024
        $region80: #{tpu_custom_call.1} parent=75 // pred_fallthru
          _
        // Predicated region
        $region81: #{tpu_custom_call.1} parent=75 // pred_check
          %p2040 = pneg %p257
        $region82: #{tpu_custom_call.1} parent=75 // pred_check_branch
          %2042 = sbr.rel (%p2040) target = $region84
        $region83: #{tpu_custom_call.1} parent=75 // pred_region
          %s2043 = sand.u32 %s242, 1
          %s2044 = scalar_lea.sflag [#allocation10], %s2043
          %s2045 = sand.u32 %s242, 1
          %s2046 = smul.addr %s2045, 8
          %s2047 = scalar_lea.vmem [#allocation9], %s2046
          %2049 = dma.done %s2044, 128
        $region84: #{tpu_custom_call.1} parent=75 // pred_fallthru
          _
      $region76: #{tpu_custom_call.1} parent=5 // pred_fallthru
        _
    $region6: #{tpu_custom_call.1} parent=1 // loop_footer
      %s28 = sadd.s32 1, %s24
    $region7: #{tpu_custom_call.1} parent=1 // loop_footer_branch
      %23 = sbr.rel target = $region3
    $region8: #{tpu_custom_call.1} parent=1 // loop_exit
      _
    %2050 = vsyncpa [#allocation3], 1
    %s2051 = scalar_lea.sflag [#allocation3], 1
    %2052 = vsyncpa %s2051, 1
    %2053 = vsyncpa [#allocation6], 1
    %2054 = vsyncpa [#allocation4], 1
    %s2055 = scalar_lea.sflag [#allocation4], 1
    %2056 = vsyncpa %s2055, 1
    %2057 = vsyncpa [#allocation10], 1
    %s2058 = scalar_lea.sflag [#allocation10], 1
    %2059 = vsyncpa %s2058, 1

</llo_original>
